<compile_context>
chip_gen: v7x
topology: tpu7x:2x2x1
jax: 0.10.0
libtpu: 0.0.40
codegen_flags: <defaults>
</compile_context>

<pallas_src>
import jax
import jax.numpy as jnp
from jax.experimental import pallas as pl
from jax.experimental.pallas import tpu as pltpu

EPS = 1e-5  # torch.nn.InstanceNorm2d default


def conv_block_forward(x, weight, bias=None, *, kernel_size=3, padding=1):
    """ConvBlock forward: Conv2d(K, stride=1, padding, padding_mode='reflect')
    -> InstanceNorm2d(affine=False) -> ReLU.

    x:      (N, Cin, H, W) float32
    weight: (Cout, Cin, K, K)
    bias:   (Cout,) or None. Accepted for API parity but never used: it is
            cancelled exactly by InstanceNorm's per-(sample,channel) mean
            subtraction (the reference below keeps it and still matches).
    """
    del bias  # mathematically cancelled by InstanceNorm2d(affine=False)

    N, Cin, H, W = x.shape
    Cout = weight.shape[0]
    K = kernel_size
    assert weight.shape == (Cout, Cin, K, K)
    p = padding

    Hp, Wp = H + 2 * p, W + 2 * p
    Hout, Wout = Hp - K + 1, Wp - K + 1            # stride = 1 output size
    S = Hp * Wp                                    # flattened padded image
    SP = ((S + 127) // 128) * 128                  # per-sample lane stride (128-aligned)
    NSP = N * SP                                   # fused batch*spatial lane axis
    MR = (K - 1) * (Wp + 1)                        # right margin so shifted slices stay in-bounds
    KK = K * K
    inv_hw = 1.0 / float(Hout * Wout)

    # ---------------- host-side layout plumbing (no im2col) ----------------
    xp = jnp.pad(x, ((0, 0), (0, 0), (p, p), (p, p)), mode="reflect")
    xf = xp.transpose(1, 0, 2, 3).reshape(Cin, N, S)        # (Cin, N, Hp*Wp)
    xf = jnp.pad(xf, ((0, 0), (0, 0), (0, SP - S)))         # pad each sample chunk to SP
    xe = jnp.pad(xf.reshape(Cin, NSP), ((0, 0), (0, MR)))   # (Cin, NSP + MR)
    xe = xe.astype(jnp.bfloat16)                            # bf16 in HBM: half the read bytes

    # Weight taps, q = i*K + j, each tap (Cout, Cin); pre-cast to bf16 for the MXU.
    w_taps = weight.transpose(2, 3, 0, 1).reshape(KK, Cout, Cin).astype(jnp.bfloat16)

    # Per-sample membership/validity mask: valid[n, n*SP + h*Wp + w] = 1 for
    # h < Hout, w < Wout (top-left anchored output positions), else 0.  Serves
    # both as the segment matrix for the InstanceNorm reductions and as the
    # broadcast matrix for mean / rstd (all tiny MXU matmuls).
    m2 = jnp.zeros((Hp, Wp), jnp.float32).at[:Hout, :Wout].set(1.0)
    mflat = jnp.pad(m2.reshape(S), (0, SP - S))
    valid = (jnp.eye(N, dtype=jnp.float32)[:, :, None] * mflat[None, None, :]
             ).reshape(N, NSP)

    def kernel(xe_ref, w_ref, valid_ref, o_ref):
        xe_v = xe_ref[...]                         # (Cin, NSP+MR) bf16, loaded once
        w = w_ref[...]                             # (KK, Cout, Cin) bf16
        vmask = valid_ref[...]                     # (N, NSP) f32

        # --- Conv2d as K*K accumulated MXU matmuls over in-VMEM shifted views ---
        y = jnp.zeros((Cout, NSP), jnp.float32)
        for q in range(KK):
            i, j = q // K, q % K
            d = i * Wp + j                         # static lane offset of this tap
            y = y + jnp.dot(w[q], xe_v[:, d:d + NSP],
                            preferred_element_type=jnp.float32)

        # --- InstanceNorm2d (affine=False, biased variance, eps=1e-5) ---
        # per-(sample,channel) stats via segment matmuls against `vmask`.
        sums = jax.lax.dot_general(
            y, vmask, dimension_numbers=(((1,), (1,)), ((), ())),
            preferred_element_type=jnp.float32)                     # (Cout, N)
        mean = sums * inv_hw
        mean_b = jnp.dot(mean, vmask, preferred_element_type=jnp.float32)   # (Cout, NSP)
        dev = y - mean_b                                                     # centered once
        ssq = jax.lax.dot_general(
            dev * dev, vmask, dimension_numbers=(((1,), (1,)), ((), ())),
            preferred_element_type=jnp.float32)                     # (Cout, N)
        rstd = jax.lax.rsqrt(ssq * inv_hw + EPS)                     # (Cout, N)
        rstd_b = jnp.dot(rstd, vmask, preferred_element_type=jnp.float32)   # (Cout, NSP)

        # --- ReLU (non-valid lanes come out exactly 0 since rstd_b == 0 there) ---
        o_ref[...] = jnp.maximum(dev * rstd_b, 0.0).astype(o_ref.dtype)

    out = pl.pallas_call(
        kernel,
        out_shape=jax.ShapeDtypeStruct((Cout, NSP), jnp.float32),
        grid_spec=pltpu.PrefetchScalarGridSpec(
            num_scalar_prefetch=0,
            grid=(1,),                              # whole batch in one fat, lane-dense step
            in_specs=[
                pl.BlockSpec((Cin, NSP + MR), lambda i: (0, 0)),
                pl.BlockSpec((KK, Cout, Cin), lambda i: (0, 0, 0)),
                pl.BlockSpec((N, NSP), lambda i: (0, 0)),
            ],
            out_specs=pl.BlockSpec((Cout, NSP), lambda i: (0, 0)),
        ),
        compiler_params=pltpu.CompilerParams(
            dimension_semantics=("arbitrary",)),
    )(xe, w_taps, valid)

    # (Cout, N*SP) -> (N, Cout, Hout, Wout)
    out = out.reshape(Cout, N, SP)[:, :, :S].reshape(Cout, N, Hp, Wp)
    out = out[:, :, :Hout, :Wout].transpose(1, 0, 2, 3)
    return out


def _reference(x, weight, bias, *, padding=1):
    """Pure-JAX f32 reference (bias included to show it is cancelled)."""
    xp = jnp.pad(x, ((0, 0), (0, 0), (padding, padding), (padding, padding)),
                 mode="reflect")
    y = jax.lax.conv_general_dilated(
        xp, weight, window_strides=(1, 1), padding="VALID",
        dimension_numbers=("NCHW", "OIHW", "NCHW"))
    if bias is not None:
        y = y + bias.reshape(1, -1, 1, 1)
    mean = jnp.mean(y, axis=(2, 3), keepdims=True)
    var = jnp.mean((y - mean) ** 2, axis=(2, 3), keepdims=True)
    y = (y - mean) * jax.lax.rsqrt(var + EPS)
    return jnp.maximum(y, 0.0)


if __name__ == "__main__":
    # ConvBlock(in_channels=4, out_channels=8, down=True, use_act=True,
    #           kernel_size=3, stride=1, padding=1)
    N, Cin, Cout, H, W, K = 2, 4, 8, 16, 16, 3

    key = jax.random.PRNGKey(0)
    kx, kw, kb = jax.random.split(key, 3)
    x = jax.random.normal(kx, (N, Cin, H, W), dtype=jnp.float32)
    weight = 0.1 * jax.random.normal(kw, (Cout, Cin, K, K), dtype=jnp.float32)
    bias = 0.1 * jax.random.normal(kb, (Cout,), dtype=jnp.float32)

    out = conv_block_forward(x, weight, bias, kernel_size=K, padding=1)
    out = jax.block_until_ready(out)

    ref = _reference(x, weight, bias, padding=1)
    assert out.shape == ref.shape == (N, Cout, H, W)
    # bf16 MXU operands (f32 accumulation) -> tolerance sized for bf16 conv inputs.
    err = float(jnp.max(jnp.abs(out - ref)))
    assert jnp.allclose(out, ref, atol=3e-2, rtol=3e-2), f"max abs err={err}"

    print("KERNEL_OK")
</pallas_src>

<mosaic_0001>
module attributes {stable_mosaic.version = 11 : i64} {
  func.func @kernel(%arg0: i32, %arg1: memref<4x806xbf16, #tpu.memory_space<vmem>>, %arg2: memref<9x8x4xbf16, #tpu.memory_space<vmem>>, %arg3: memref<2x768xf32, #tpu.memory_space<vmem>>, %arg4: memref<8x768xf32, #tpu.memory_space<vmem>>) attributes {dimension_semantics = [#tpu.dimension_semantics<arbitrary>], iteration_bounds = array<i64: 1>, scalar_prefetch = 0 : i64, scratch_operands = 0 : i64, tpu.core_type = #tpu.core_type<tc>, window_params = [{pipeline_mode = #tpu.pipeline_mode<synchronous>, transform_indices = @transform_0, window_bounds = array<i64: 4, 806>}, {pipeline_mode = #tpu.pipeline_mode<synchronous>, transform_indices = @transform_1, window_bounds = array<i64: 9, 8, 4>}, {pipeline_mode = #tpu.pipeline_mode<synchronous>, transform_indices = @transform_2, window_bounds = array<i64: 2, 768>}, {pipeline_mode = #tpu.pipeline_mode<synchronous>, transform_indices = @transform_3, window_bounds = array<i64: 8, 768>}]} {
    %c0 = arith.constant 0 : index
    %c0_0 = arith.constant 0 : index
    %0 = vector.load %arg1[%c0, %c0_0] : memref<4x806xbf16, #tpu.memory_space<vmem>>, vector<4x806xbf16>
    %c0_1 = arith.constant 0 : index
    %c0_2 = arith.constant 0 : index
    %c0_3 = arith.constant 0 : index
    %1 = vector.load %arg2[%c0_1, %c0_2, %c0_3] : memref<9x8x4xbf16, #tpu.memory_space<vmem>>, vector<9x8x4xbf16>
    %c0_4 = arith.constant 0 : index
    %c0_5 = arith.constant 0 : index
    %2 = vector.load %arg3[%c0_4, %c0_5] : memref<2x768xf32, #tpu.memory_space<vmem>>, vector<2x768xf32>
    %cst = arith.constant 0.000000e+00 : f32
    %3 = vector.broadcast %cst : f32 to vector<8x768xf32>
    %4 = vector.extract_strided_slice %1 {offsets = [0, 0, 0], sizes = [1, 8, 4], strides = [1, 1, 1]} : vector<9x8x4xbf16> to vector<1x8x4xbf16>
    %5 = vector.shape_cast %4 : vector<1x8x4xbf16> to vector<8x4xbf16>
    %6 = vector.extract_strided_slice %0 {offsets = [0, 0], sizes = [4, 768], strides = [1, 1]} : vector<4x806xbf16> to vector<4x768xbf16>
    %cst_6 = arith.constant dense<0.000000e+00> : vector<8x768xf32>
    %7 = tpu.matmul %5, %6, %cst_6 {dimension_numbers = #tpu.dot_dimension_numbers<[1], [0], [0], [1], [0, 0, 1, 1], [], []>} : vector<8x4xbf16>, vector<4x768xbf16>, vector<8x768xf32> -> vector<8x768xf32>
    %8 = arith.addf %3, %7 : vector<8x768xf32>
    %9 = vector.extract_strided_slice %1 {offsets = [1, 0, 0], sizes = [1, 8, 4], strides = [1, 1, 1]} : vector<9x8x4xbf16> to vector<1x8x4xbf16>
    %10 = vector.shape_cast %9 : vector<1x8x4xbf16> to vector<8x4xbf16>
    %11 = vector.extract_strided_slice %0 {offsets = [0, 1], sizes = [4, 768], strides = [1, 1]} : vector<4x806xbf16> to vector<4x768xbf16>
    %cst_7 = arith.constant dense<0.000000e+00> : vector<8x768xf32>
    %12 = tpu.matmul %10, %11, %cst_7 {dimension_numbers = #tpu.dot_dimension_numbers<[1], [0], [0], [1], [0, 0, 1, 1], [], []>} : vector<8x4xbf16>, vector<4x768xbf16>, vector<8x768xf32> -> vector<8x768xf32>
    %13 = arith.addf %8, %12 : vector<8x768xf32>
    %14 = vector.extract_strided_slice %1 {offsets = [2, 0, 0], sizes = [1, 8, 4], strides = [1, 1, 1]} : vector<9x8x4xbf16> to vector<1x8x4xbf16>
    %15 = vector.shape_cast %14 : vector<1x8x4xbf16> to vector<8x4xbf16>
    %16 = vector.extract_strided_slice %0 {offsets = [0, 2], sizes = [4, 768], strides = [1, 1]} : vector<4x806xbf16> to vector<4x768xbf16>
    %cst_8 = arith.constant dense<0.000000e+00> : vector<8x768xf32>
    %17 = tpu.matmul %15, %16, %cst_8 {dimension_numbers = #tpu.dot_dimension_numbers<[1], [0], [0], [1], [0, 0, 1, 1], [], []>} : vector<8x4xbf16>, vector<4x768xbf16>, vector<8x768xf32> -> vector<8x768xf32>
    %18 = arith.addf %13, %17 : vector<8x768xf32>
    %19 = vector.extract_strided_slice %1 {offsets = [3, 0, 0], sizes = [1, 8, 4], strides = [1, 1, 1]} : vector<9x8x4xbf16> to vector<1x8x4xbf16>
    %20 = vector.shape_cast %19 : vector<1x8x4xbf16> to vector<8x4xbf16>
    %21 = vector.extract_strided_slice %0 {offsets = [0, 18], sizes = [4, 768], strides = [1, 1]} : vector<4x806xbf16> to vector<4x768xbf16>
    %cst_9 = arith.constant dense<0.000000e+00> : vector<8x768xf32>
    %22 = tpu.matmul %20, %21, %cst_9 {dimension_numbers = #tpu.dot_dimension_numbers<[1], [0], [0], [1], [0, 0, 1, 1], [], []>} : vector<8x4xbf16>, vector<4x768xbf16>, vector<8x768xf32> -> vector<8x768xf32>
    %23 = arith.addf %18, %22 : vector<8x768xf32>
    %24 = vector.extract_strided_slice %1 {offsets = [4, 0, 0], sizes = [1, 8, 4], strides = [1, 1, 1]} : vector<9x8x4xbf16> to vector<1x8x4xbf16>
    %25 = vector.shape_cast %24 : vector<1x8x4xbf16> to vector<8x4xbf16>
    %26 = vector.extract_strided_slice %0 {offsets = [0, 19], sizes = [4, 768], strides = [1, 1]} : vector<4x806xbf16> to vector<4x768xbf16>
    %cst_10 = arith.constant dense<0.000000e+00> : vector<8x768xf32>
    %27 = tpu.matmul %25, %26, %cst_10 {dimension_numbers = #tpu.dot_dimension_numbers<[1], [0], [0], [1], [0, 0, 1, 1], [], []>} : vector<8x4xbf16>, vector<4x768xbf16>, vector<8x768xf32> -> vector<8x768xf32>
    %28 = arith.addf %23, %27 : vector<8x768xf32>
    %29 = vector.extract_strided_slice %1 {offsets = [5, 0, 0], sizes = [1, 8, 4], strides = [1, 1, 1]} : vector<9x8x4xbf16> to vector<1x8x4xbf16>
    %30 = vector.shape_cast %29 : vector<1x8x4xbf16> to vector<8x4xbf16>
    %31 = vector.extract_strided_slice %0 {offsets = [0, 20], sizes = [4, 768], strides = [1, 1]} : vector<4x806xbf16> to vector<4x768xbf16>
    %cst_11 = arith.constant dense<0.000000e+00> : vector<8x768xf32>
    %32 = tpu.matmul %30, %31, %cst_11 {dimension_numbers = #tpu.dot_dimension_numbers<[1], [0], [0], [1], [0, 0, 1, 1], [], []>} : vector<8x4xbf16>, vector<4x768xbf16>, vector<8x768xf32> -> vector<8x768xf32>
    %33 = arith.addf %28, %32 : vector<8x768xf32>
    %34 = vector.extract_strided_slice %1 {offsets = [6, 0, 0], sizes = [1, 8, 4], strides = [1, 1, 1]} : vector<9x8x4xbf16> to vector<1x8x4xbf16>
    %35 = vector.shape_cast %34 : vector<1x8x4xbf16> to vector<8x4xbf16>
    %36 = vector.extract_strided_slice %0 {offsets = [0, 36], sizes = [4, 768], strides = [1, 1]} : vector<4x806xbf16> to vector<4x768xbf16>
    %cst_12 = arith.constant dense<0.000000e+00> : vector<8x768xf32>
    %37 = tpu.matmul %35, %36, %cst_12 {dimension_numbers = #tpu.dot_dimension_numbers<[1], [0], [0], [1], [0, 0, 1, 1], [], []>} : vector<8x4xbf16>, vector<4x768xbf16>, vector<8x768xf32> -> vector<8x768xf32>
    %38 = arith.addf %33, %37 : vector<8x768xf32>
    %39 = vector.extract_strided_slice %1 {offsets = [7, 0, 0], sizes = [1, 8, 4], strides = [1, 1, 1]} : vector<9x8x4xbf16> to vector<1x8x4xbf16>
    %40 = vector.shape_cast %39 : vector<1x8x4xbf16> to vector<8x4xbf16>
    %41 = vector.extract_strided_slice %0 {offsets = [0, 37], sizes = [4, 768], strides = [1, 1]} : vector<4x806xbf16> to vector<4x768xbf16>
    %cst_13 = arith.constant dense<0.000000e+00> : vector<8x768xf32>
    %42 = tpu.matmul %40, %41, %cst_13 {dimension_numbers = #tpu.dot_dimension_numbers<[1], [0], [0], [1], [0, 0, 1, 1], [], []>} : vector<8x4xbf16>, vector<4x768xbf16>, vector<8x768xf32> -> vector<8x768xf32>
    %43 = arith.addf %38, %42 : vector<8x768xf32>
    %44 = vector.extract_strided_slice %1 {offsets = [8, 0, 0], sizes = [1, 8, 4], strides = [1, 1, 1]} : vector<9x8x4xbf16> to vector<1x8x4xbf16>
    %45 = vector.shape_cast %44 : vector<1x8x4xbf16> to vector<8x4xbf16>
    %46 = vector.extract_strided_slice %0 {offsets = [0, 38], sizes = [4, 768], strides = [1, 1]} : vector<4x806xbf16> to vector<4x768xbf16>
    %cst_14 = arith.constant dense<0.000000e+00> : vector<8x768xf32>
    %47 = tpu.matmul %45, %46, %cst_14 {dimension_numbers = #tpu.dot_dimension_numbers<[1], [0], [0], [1], [0, 0, 1, 1], [], []>} : vector<8x4xbf16>, vector<4x768xbf16>, vector<8x768xf32> -> vector<8x768xf32>
    %48 = arith.addf %43, %47 : vector<8x768xf32>
    %cst_15 = arith.constant dense<0.000000e+00> : vector<8x2xf32>
    %49 = tpu.matmul %48, %2, %cst_15 {dimension_numbers = #tpu.dot_dimension_numbers<[1], [1], [0], [0], [0, 0, 1, 0], [], []>} : vector<8x768xf32>, vector<2x768xf32>, vector<8x2xf32> -> vector<8x2xf32>
    %cst_16 = arith.constant 3.906250e-03 : f32
    %50 = vector.broadcast %cst_16 : f32 to vector<8x2xf32>
    %51 = arith.mulf %49, %50 : vector<8x2xf32>
    %cst_17 = arith.constant dense<0.000000e+00> : vector<8x768xf32>
    %52 = tpu.matmul %51, %2, %cst_17 {dimension_numbers = #tpu.dot_dimension_numbers<[1], [0], [0], [1], [0, 0, 1, 1], [], []>} : vector<8x2xf32>, vector<2x768xf32>, vector<8x768xf32> -> vector<8x768xf32>
    %53 = arith.subf %48, %52 : vector<8x768xf32>
    %54 = arith.mulf %53, %53 : vector<8x768xf32>
    %cst_18 = arith.constant dense<0.000000e+00> : vector<8x2xf32>
    %55 = tpu.matmul %54, %2, %cst_18 {dimension_numbers = #tpu.dot_dimension_numbers<[1], [1], [0], [0], [0, 0, 1, 0], [], []>} : vector<8x768xf32>, vector<2x768xf32>, vector<8x2xf32> -> vector<8x2xf32>
    %cst_19 = arith.constant 3.906250e-03 : f32
    %56 = vector.broadcast %cst_19 : f32 to vector<8x2xf32>
    %57 = arith.mulf %55, %56 : vector<8x2xf32>
    %cst_20 = arith.constant 9.99999974E-6 : f32
    %58 = vector.broadcast %cst_20 : f32 to vector<8x2xf32>
    %59 = arith.addf %57, %58 : vector<8x2xf32>
    %60 = math.rsqrt %59 : vector<8x2xf32>
    %cst_21 = arith.constant dense<0.000000e+00> : vector<8x768xf32>
    %61 = tpu.matmul %60, %2, %cst_21 {dimension_numbers = #tpu.dot_dimension_numbers<[1], [0], [0], [1], [0, 0, 1, 1], [], []>} : vector<8x2xf32>, vector<2x768xf32>, vector<8x768xf32> -> vector<8x768xf32>
    %62 = arith.mulf %53, %61 : vector<8x768xf32>
    %cst_22 = arith.constant 0.000000e+00 : f32
    %63 = vector.broadcast %cst_22 : f32 to vector<8x768xf32>
    %64 = arith.maximumf %62, %63 : vector<8x768xf32>
    %c0_23 = arith.constant 0 : index
    %c0_24 = arith.constant 0 : index
    %65 = vector.load %arg4[%c0_23, %c0_24] : memref<8x768xf32, #tpu.memory_space<vmem>>, vector<8x768xf32>
    tpu.vector_store %arg4[%c0_23, %c0_24], %64 {strides = array<i32>} : memref<8x768xf32, #tpu.memory_space<vmem>>, vector<8x768xf32>,
    return
  }
  func.func @transform_0(%arg0: i32) -> (i32, i32) {
    %c0_i32 = arith.constant 0 : i32
    %c0_i32_0 = arith.constant 0 : i32
    %c0_i32_1 = arith.constant 0 : i32
    return %c0_i32, %c0_i32_0 : i32, i32
  }
  func.func @transform_1(%arg0: i32) -> (i32, i32, i32) {
    %c0_i32 = arith.constant 0 : i32
    %c0_i32_0 = arith.constant 0 : i32
    %c0_i32_1 = arith.constant 0 : i32
    %c0_i32_2 = arith.constant 0 : i32
    return %c0_i32, %c0_i32_0, %c0_i32_1 : i32, i32, i32
  }
  func.func @transform_2(%arg0: i32) -> (i32, i32) {
    %c0_i32 = arith.constant 0 : i32
    %c0_i32_0 = arith.constant 0 : i32
    %c0_i32_1 = arith.constant 0 : i32
    return %c0_i32, %c0_i32_0 : i32, i32
  }
  func.func @transform_3(%arg0: i32) -> (i32, i32) {
    %c0_i32 = arith.constant 0 : i32
    %c0_i32_0 = arith.constant 0 : i32
    %c0_i32_1 = arith.constant 0 : i32
    return %c0_i32, %c0_i32_0 : i32, i32
  }
}

</mosaic_0001>

<llo_original>
// kernel: tpu_custom_call.1
$region0: #{tpu_custom_call.1}
  #allocation0 [shape = 'u32[]', space=smem, size = 0x4, offset = 0x4, fixed_abs, tag = 'smem constant byte address 0x4 - core index']
  #allocation1 [shape = 'u32[144,128]{1,0:T(1,128)}', space=vmem, size = 0x12000, scoped, tag = 'internal scratch']
  %s0 = inlined_call_operand.vmem [shape: bf16[4,806], index: 0, kind: input, shape index: {}]
  %s1 = inlined_call_operand.vmem [shape: bf16[9,8,4], index: 1, kind: input, shape index: {}]
  %s2 = inlined_call_operand.vmem [shape: f32[2,768], index: 2, kind: input, shape index: {}]
  %s3 = inlined_call_operand.hbm [shape: f32[8,768], index: 3, kind: output, shape index: {}]
  %s4 = sld [smem:[#allocation0]]
  $region22: #{tpu_custom_call.1} parent=0
    _
  %s6 = ssub.s32 1, %s4
  %s7 = scalar_select 0, %s6, %s4
  $region1: #{tpu_custom_call.1} parent=0
    #allocation2 [shape = 'u8[24576]{0}', space=vmem, size = 0x6000, scoped, tag = 'output window, operand 0, single buffered']
    #allocation3 [shape = 's32[1]{0}', space=sflag, size = 0x4, scoped, tag = 'scoped memory for tpu_custom_call.1']
    %8 = vsyncpa [#allocation3], 0
    // Predicated region
    $region2: #{tpu_custom_call.1} parent=1 // pred_check
      _
    $region3: #{tpu_custom_call.1} parent=1 // pred_check_branch
      %10 = sbr.rel (0) target = $region5
    $region4: #{tpu_custom_call.1} parent=1 // pred_region
      _
    $region5: #{tpu_custom_call.1} parent=1 // pred_fallthru
      _
    // Predicated region
    $region6: #{tpu_custom_call.1} parent=1 // pred_check
      _
    $region7: #{tpu_custom_call.1} parent=1 // pred_check_branch
      %12 = sbr.rel (0) target = $region9
    $region8: #{tpu_custom_call.1} parent=1 // pred_region
      _
    $region9: #{tpu_custom_call.1} parent=1 // pred_fallthru
      _
    // Predicated region
    $region10: #{tpu_custom_call.1} parent=1 // pred_check
      _
    $region11: #{tpu_custom_call.1} parent=1 // pred_check_branch
      %14 = sbr.rel (0) target = $region13
    $region12: #{tpu_custom_call.1} parent=1 // pred_region
      _
    $region13: #{tpu_custom_call.1} parent=1 // pred_fallthru
      _
    %v16 = vld [vmem:[%s0] sm:$0xff]
    %v17 = vld [vmem:[%s0 + $0x8] sm:$0x3f]
    %v18 = vld [vmem:[%s1] sm:$0xf]
    %v19 = vld [vmem:[%s1 + $0x4] sm:$0xf]
    %v20 = vld [vmem:[%s1 + $0x8] sm:$0xf]
    %v21 = vld [vmem:[%s1 + $0xc] sm:$0xf]
    %v22 = vld [vmem:[%s1 + $0x10] sm:$0xf]
    %v23 = vld [vmem:[%s1 + $0x14] sm:$0xf]
    %v24 = vld [vmem:[%s1 + $0x18] sm:$0xf]
    %v25 = vld [vmem:[%s1 + $0x1c] sm:$0xf]
    %v26 = vld [vmem:[%s1 + $0x20] sm:$0xf]
    %v27 = vld [vmem:[%s2] sm:$0xff]
    %v28 = vld [vmem:[%s2 + $0x8] sm:$0xf]
    %v31 = vcombine.high %v16, %v16
    %v33 = vunpack.c.l.s4 1983009808
    %v34 = vunpack.c.0.s8 %v33
    %v35 = vlaneseq
    %v36 = vshrl.u32 %v35, 7
    %v37 = vsub.s32 %v34, %v36
    %v38 = vrot.slane %v16, %v37
    %v40 = vunpack.c.l.s4 1983009808
    %v41 = vunpack.c.0.s8 %v40
    %v42 = vlaneseq
    %v43 = vshrl.u32 %v42, 7
    %v44 = vsub.s32 %v41, %v43
    %v45 = vrot.slane %v31, %v44
    %v46 = vcombine.high %v38, %v38
    %v47 = vcombine.high %v45, %v45
    %v48 = vcombine.high %v17, %v17
    %v50 = vunpack.c.l.s4 1983009808
    %v51 = vunpack.c.0.s8 %v50
    %v52 = vlaneseq
    %v53 = vshrl.u32 %v52, 7
    %v54 = vsub.s32 %v51, %v53
    %v55 = vrot.slane %v17, %v54
    %v57 = vunpack.c.l.s4 1983009808
    %v58 = vunpack.c.0.s8 %v57
    %v59 = vlaneseq
    %v60 = vshrl.u32 %v59, 7
    %v61 = vsub.s32 %v58, %v60
    %v62 = vrot.slane %v48, %v61
    %v63 = vcombine.high %v55, %v55
    %64 = vrot.lane.b32.xlu0 %v38, 127
    %v65 = vpop.permute.xlu0 %64
    %66 = vrot.lane.b32.xlu0 %v46, 127
    %v67 = vpop.permute.xlu0 %66
    %68 = vrot.lane.b32.xlu0 %v45, 127
    %v69 = vpop.permute.xlu0 %68
    %70 = vrot.lane.b32.xlu0 %v47, 127
    %v71 = vpop.permute.xlu0 %70
    %72 = vrot.lane.b32.xlu0 %v55, 127
    %v73 = vpop.permute.xlu0 %72
    %74 = vrot.lane.b32.xlu0 %v63, 127
    %v75 = vpop.permute.xlu0 %74
    %76 = vrot.lane.b32.xlu0 %v62, 127
    %v77 = vpop.permute.xlu0 %76
    %vm78 = vcmask 1039360
    %v79 = vsel %vm78, %v65, %v67
    %v80 = vsel %vm78, %v67, %v69
    %v81 = vsel %vm78, %v69, %v71
    %v82 = vsel %vm78, %v71, %v73
    %v83 = vsel %vm78, %v73, %v75
    %v84 = vsel %vm78, %v75, %v77
    %vm85 = vcmask 31744
    %v87 = vsel %vm85, %v19, 0
    %vm89 = vcmask 1041408
    %v91 = vsel %vm89, %v79, 0
    %v94 = vsel %vm89, %v80, 0
    %v97 = vsel %vm89, %v81, 0
    %v100 = vsel %vm89, %v82, 0
    %v103 = vsel %vm89, %v83, 0
    %v106 = vsel %vm89, %v84, 0
    %108 = vmatprep.subr.bf16.mxu0 %v94
    %109 = vmatpush1.bf16.msra.mxu0 %v91
    %110 = vmatprep.subr.bf16.mxu0 0
    %111 = vmatpush1.bf16.msra.mxu0 0
    %112 = vmatprep.subr.bf16.mxu0 0
    %113 = vmatpush1.bf16.msra.mxu0 0
    %114 = vmatprep.subr.bf16.mxu0 0
    %115 = vmatpush1.bf16.msra.mxu0 0
    %116 = vmatprep.subr.bf16.mxu0 0
    %117 = vmatpush1.bf16.msra.mxu0 0
    %118 = vmatprep.subr.bf16.mxu0 0
    %119 = vmatpush1.bf16.msra.mxu0 0
    %120 = vmatprep.subr.bf16.mxu0 0
    %121 = vmatpush1.bf16.msra.mxu0 0
    %122 = vmatprep.subr.bf16.mxu0 0
    %123 = vmatpush1.bf16.msra.mxu0 0
    %124 = vmatprep.subr.bf16.mxu0 0
    %125 = vmatpush1.bf16.msra.mxu0 0
    %126 = vmatprep.subr.bf16.mxu0 0
    %127 = vmatpush1.bf16.msra.mxu0 0
    %128 = vmatprep.subr.bf16.mxu0 0
    %129 = vmatpush1.bf16.msra.mxu0 0
    %130 = vmatprep.subr.bf16.mxu0 0
    %131 = vmatpush1.bf16.msra.mxu0 0
    %132 = vmatprep.subr.bf16.mxu0 0
    %133 = vmatpush1.bf16.msra.mxu0 0
    %134 = vmatprep.subr.bf16.mxu0 0
    %135 = vmatpush1.bf16.msra.mxu0 0
    %136 = vmatprep.subr.bf16.mxu0 0
    %137 = vmatpush1.bf16.msra.mxu0 0
    %138 = vmatprep.subr.bf16.mxu0 0
    %139 = vmatpush1.bf16.msra.mxu0 0
    %140 = vmatprep.mubr.bf16.mxu0 0
    %141 = vmatmul.mubr.bf16.gmra.mrb[0].mxu0 %v87
    %v142 = vpop.f32.mrb[0].mxu0
    %v143 = vadd.f32 0.0, %v142
    %v144 = vpop.f32.mrb[0].mxu0
    %v145 = vadd.f32 0.0, %v144
    %v146 = vpop.f32.mrb[0].mxu0
    %v147 = vpop.f32.mrb[0].mxu0
    %148 = vdwg.mxu0
    %149 = vmatprep.subr.bf16.mxu0 %v100
    %150 = vmatpush1.bf16.msra.mxu0 %v97
    %151 = vmatprep.subr.bf16.mxu0 0
    %152 = vmatpush1.bf16.msra.mxu0 0
    %153 = vmatprep.subr.bf16.mxu0 0
    %154 = vmatpush1.bf16.msra.mxu0 0
    %155 = vmatprep.subr.bf16.mxu0 0
    %156 = vmatpush1.bf16.msra.mxu0 0
    %157 = vmatprep.subr.bf16.mxu0 0
    %158 = vmatpush1.bf16.msra.mxu0 0
    %159 = vmatprep.subr.bf16.mxu0 0
    %160 = vmatpush1.bf16.msra.mxu0 0
    %161 = vmatprep.subr.bf16.mxu0 0
    %162 = vmatpush1.bf16.msra.mxu0 0
    %163 = vmatprep.subr.bf16.mxu0 0
    %164 = vmatpush1.bf16.msra.mxu0 0
    %165 = vmatprep.subr.bf16.mxu0 0
    %166 = vmatpush1.bf16.msra.mxu0 0
    %167 = vmatprep.subr.bf16.mxu0 0
    %168 = vmatpush1.bf16.msra.mxu0 0
    %169 = vmatprep.subr.bf16.mxu0 0
    %170 = vmatpush1.bf16.msra.mxu0 0
    %171 = vmatprep.subr.bf16.mxu0 0
    %172 = vmatpush1.bf16.msra.mxu0 0
    %173 = vmatprep.subr.bf16.mxu0 0
    %174 = vmatpush1.bf16.msra.mxu0 0
    %175 = vmatprep.subr.bf16.mxu0 0
    %176 = vmatpush1.bf16.msra.mxu0 0
    %177 = vmatprep.subr.bf16.mxu0 0
    %178 = vmatpush1.bf16.msra.mxu0 0
    %179 = vmatprep.subr.bf16.mxu0 0
    %180 = vmatpush1.bf16.msra.mxu0 0
    %181 = vmatprep.mubr.bf16.mxu0 0
    %182 = vmatmul.mubr.bf16.gmra.mrb[0].mxu0 %v87
    %v183 = vpop.f32.mrb[0].mxu0
    %v184 = vadd.f32 0.0, %v183
    %v185 = vpop.f32.mrb[0].mxu0
    %v186 = vadd.f32 0.0, %v185
    %v187 = vpop.f32.mrb[0].mxu0
    %v188 = vpop.f32.mrb[0].mxu0
    %189 = vdwg.mxu0
    %190 = vmatprep.subr.bf16.mxu0 %v106
    %191 = vmatpush1.bf16.msra.mxu0 %v103
    %192 = vmatprep.subr.bf16.mxu0 0
    %193 = vmatpush1.bf16.msra.mxu0 0
    %194 = vmatprep.subr.bf16.mxu0 0
    %195 = vmatpush1.bf16.msra.mxu0 0
    %196 = vmatprep.subr.bf16.mxu0 0
    %197 = vmatpush1.bf16.msra.mxu0 0
    %198 = vmatprep.subr.bf16.mxu0 0
    %199 = vmatpush1.bf16.msra.mxu0 0
    %200 = vmatprep.subr.bf16.mxu0 0
    %201 = vmatpush1.bf16.msra.mxu0 0
    %202 = vmatprep.subr.bf16.mxu0 0
    %203 = vmatpush1.bf16.msra.mxu0 0
    %204 = vmatprep.subr.bf16.mxu0 0
    %205 = vmatpush1.bf16.msra.mxu0 0
    %206 = vmatprep.subr.bf16.mxu0 0
    %207 = vmatpush1.bf16.msra.mxu0 0
    %208 = vmatprep.subr.bf16.mxu0 0
    %209 = vmatpush1.bf16.msra.mxu0 0
    %210 = vmatprep.subr.bf16.mxu0 0
    %211 = vmatpush1.bf16.msra.mxu0 0
    %212 = vmatprep.subr.bf16.mxu0 0
    %213 = vmatpush1.bf16.msra.mxu0 0
    %214 = vmatprep.subr.bf16.mxu0 0
    %215 = vmatpush1.bf16.msra.mxu0 0
    %216 = vmatprep.subr.bf16.mxu0 0
    %217 = vmatpush1.bf16.msra.mxu0 0
    %218 = vmatprep.subr.bf16.mxu0 0
    %219 = vmatpush1.bf16.msra.mxu0 0
    %220 = vmatprep.subr.bf16.mxu0 0
    %221 = vmatpush1.bf16.msra.mxu0 0
    %222 = vmatprep.mubr.bf16.mxu0 0
    %223 = vmatmul.mubr.bf16.gmra.mrb[0].mxu0 %v87
    %v224 = vpop.f32.mrb[0].mxu0
    %v225 = vadd.f32 0.0, %v224
    %v226 = vpop.f32.mrb[0].mxu0
    %v227 = vadd.f32 0.0, %v226
    %v228 = vpop.f32.mrb[0].mxu0
    %v229 = vpop.f32.mrb[0].mxu0
    %230 = vdwg.mxu0
    %v232 = vsel %vm85, %v18, 0
    %v235 = vsel %vm89, %v38, 0
    %v238 = vsel %vm89, %v46, 0
    %v241 = vsel %vm89, %v45, 0
    %v244 = vsel %vm89, %v47, 0
    %v247 = vsel %vm89, %v55, 0
    %v250 = vsel %vm89, %v63, 0
    %252 = vmatprep.subr.bf16.mxu0 %v238
    %253 = vmatpush1.bf16.msra.mxu0 %v235
    %254 = vmatprep.subr.bf16.mxu0 0
    %255 = vmatpush1.bf16.msra.mxu0 0
    %256 = vmatprep.subr.bf16.mxu0 0
    %257 = vmatpush1.bf16.msra.mxu0 0
    %258 = vmatprep.subr.bf16.mxu0 0
    %259 = vmatpush1.bf16.msra.mxu0 0
    %260 = vmatprep.subr.bf16.mxu0 0
    %261 = vmatpush1.bf16.msra.mxu0 0
    %262 = vmatprep.subr.bf16.mxu0 0
    %263 = vmatpush1.bf16.msra.mxu0 0
    %264 = vmatprep.subr.bf16.mxu0 0
    %265 = vmatpush1.bf16.msra.mxu0 0
    %266 = vmatprep.subr.bf16.mxu0 0
    %267 = vmatpush1.bf16.msra.mxu0 0
    %268 = vmatprep.subr.bf16.mxu0 0
    %269 = vmatpush1.bf16.msra.mxu0 0
    %270 = vmatprep.subr.bf16.mxu0 0
    %271 = vmatpush1.bf16.msra.mxu0 0
    %272 = vmatprep.subr.bf16.mxu0 0
    %273 = vmatpush1.bf16.msra.mxu0 0
    %274 = vmatprep.subr.bf16.mxu0 0
    %275 = vmatpush1.bf16.msra.mxu0 0
    %276 = vmatprep.subr.bf16.mxu0 0
    %277 = vmatpush1.bf16.msra.mxu0 0
    %278 = vmatprep.subr.bf16.mxu0 0
    %279 = vmatpush1.bf16.msra.mxu0 0
    %280 = vmatprep.subr.bf16.mxu0 0
    %281 = vmatpush1.bf16.msra.mxu0 0
    %282 = vmatprep.subr.bf16.mxu0 0
    %283 = vmatpush1.bf16.msra.mxu0 0
    %284 = vmatprep.mubr.bf16.mxu0 0
    %285 = vmatmul.mubr.bf16.gmra.mrb[0].mxu0 %v232
    %v286 = vpop.f32.mrb[0].mxu0
    %v287 = vadd.f32 %v143, %v286
    %v288 = vpop.f32.mrb[0].mxu0
    %v289 = vadd.f32 %v145, %v288
    %v290 = vpop.f32.mrb[0].mxu0
    %v291 = vpop.f32.mrb[0].mxu0
    %292 = vdwg.mxu0
    %293 = vmatprep.subr.bf16.mxu0 %v244
    %294 = vmatpush1.bf16.msra.mxu0 %v241
    %295 = vmatprep.subr.bf16.mxu0 0
    %296 = vmatpush1.bf16.msra.mxu0 0
    %297 = vmatprep.subr.bf16.mxu0 0
    %298 = vmatpush1.bf16.msra.mxu0 0
    %299 = vmatprep.subr.bf16.mxu0 0
    %300 = vmatpush1.bf16.msra.mxu0 0
    %301 = vmatprep.subr.bf16.mxu0 0
    %302 = vmatpush1.bf16.msra.mxu0 0
    %303 = vmatprep.subr.bf16.mxu0 0
    %304 = vmatpush1.bf16.msra.mxu0 0
    %305 = vmatprep.subr.bf16.mxu0 0
    %306 = vmatpush1.bf16.msra.mxu0 0
    %307 = vmatprep.subr.bf16.mxu0 0
    %308 = vmatpush1.bf16.msra.mxu0 0
    %309 = vmatprep.subr.bf16.mxu0 0
    %310 = vmatpush1.bf16.msra.mxu0 0
    %311 = vmatprep.subr.bf16.mxu0 0
    %312 = vmatpush1.bf16.msra.mxu0 0
    %313 = vmatprep.subr.bf16.mxu0 0
    %314 = vmatpush1.bf16.msra.mxu0 0
    %315 = vmatprep.subr.bf16.mxu0 0
    %316 = vmatpush1.bf16.msra.mxu0 0
    %317 = vmatprep.subr.bf16.mxu0 0
    %318 = vmatpush1.bf16.msra.mxu0 0
    %319 = vmatprep.subr.bf16.mxu0 0
    %320 = vmatpush1.bf16.msra.mxu0 0
    %321 = vmatprep.subr.bf16.mxu0 0
    %322 = vmatpush1.bf16.msra.mxu0 0
    %323 = vmatprep.subr.bf16.mxu0 0
    %324 = vmatpush1.bf16.msra.mxu0 0
    %325 = vmatprep.mubr.bf16.mxu0 0
    %326 = vmatmul.mubr.bf16.gmra.mrb[0].mxu0 %v232
    %v327 = vpop.f32.mrb[0].mxu0
    %v328 = vadd.f32 %v184, %v327
    %v329 = vpop.f32.mrb[0].mxu0
    %v330 = vadd.f32 %v186, %v329
    %v331 = vpop.f32.mrb[0].mxu0
    %v332 = vpop.f32.mrb[0].mxu0
    %333 = vdwg.mxu0
    %334 = vmatprep.subr.bf16.mxu0 %v250
    %335 = vmatpush1.bf16.msra.mxu0 %v247
    %336 = vmatprep.subr.bf16.mxu0 0
    %337 = vmatpush1.bf16.msra.mxu0 0
    %338 = vmatprep.subr.bf16.mxu0 0
    %339 = vmatpush1.bf16.msra.mxu0 0
    %340 = vmatprep.subr.bf16.mxu0 0
    %341 = vmatpush1.bf16.msra.mxu0 0
    %342 = vmatprep.subr.bf16.mxu0 0
    %343 = vmatpush1.bf16.msra.mxu0 0
    %344 = vmatprep.subr.bf16.mxu0 0
    %345 = vmatpush1.bf16.msra.mxu0 0
    %346 = vmatprep.subr.bf16.mxu0 0
    %347 = vmatpush1.bf16.msra.mxu0 0
    %348 = vmatprep.subr.bf16.mxu0 0
    %349 = vmatpush1.bf16.msra.mxu0 0
    %350 = vmatprep.subr.bf16.mxu0 0
    %351 = vmatpush1.bf16.msra.mxu0 0
    %352 = vmatprep.subr.bf16.mxu0 0
    %353 = vmatpush1.bf16.msra.mxu0 0
    %354 = vmatprep.subr.bf16.mxu0 0
    %355 = vmatpush1.bf16.msra.mxu0 0
    %356 = vmatprep.subr.bf16.mxu0 0
    %357 = vmatpush1.bf16.msra.mxu0 0
    %358 = vmatprep.subr.bf16.mxu0 0
    %359 = vmatpush1.bf16.msra.mxu0 0
    %360 = vmatprep.subr.bf16.mxu0 0
    %361 = vmatpush1.bf16.msra.mxu0 0
    %362 = vmatprep.subr.bf16.mxu0 0
    %363 = vmatpush1.bf16.msra.mxu0 0
    %364 = vmatprep.subr.bf16.mxu0 0
    %365 = vmatpush1.bf16.msra.mxu0 0
    %366 = vmatprep.mubr.bf16.mxu0 0
    %367 = vmatmul.mubr.bf16.gmra.mrb[0].mxu0 %v232
    %v368 = vpop.f32.mrb[0].mxu0
    %v369 = vadd.f32 %v225, %v368
    %v370 = vpop.f32.mrb[0].mxu0
    %v371 = vadd.f32 %v227, %v370
    %v372 = vpop.f32.mrb[0].mxu0
    %v373 = vpop.f32.mrb[0].mxu0
    %374 = vdwg.mxu0
    %375 = vrot.lane.b32.xlu0 %v38, 126
    %v376 = vpop.permute.xlu0 %375
    %377 = vrot.lane.b32.xlu0 %v46, 126
    %v378 = vpop.permute.xlu0 %377
    %379 = vrot.lane.b32.xlu0 %v45, 126
    %v380 = vpop.permute.xlu0 %379
    %381 = vrot.lane.b32.xlu0 %v47, 126
    %v382 = vpop.permute.xlu0 %381
    %383 = vrot.lane.b32.xlu0 %v55, 126
    %v384 = vpop.permute.xlu0 %383
    %385 = vrot.lane.b32.xlu0 %v63, 126
    %v386 = vpop.permute.xlu0 %385
    %387 = vrot.lane.b32.xlu0 %v62, 126
    %v388 = vpop.permute.xlu0 %387
    %vm389 = vcmask 1031168
    %v390 = vsel %vm389, %v376, %v378
    %v391 = vsel %vm389, %v378, %v380
    %v392 = vsel %vm389, %v380, %v382
    %v393 = vsel %vm389, %v382, %v384
    %v394 = vsel %vm389, %v384, %v386
    %v395 = vsel %vm389, %v386, %v388
    %v397 = vsel %vm85, %v20, 0
    %v400 = vsel %vm89, %v390, 0
    %v403 = vsel %vm89, %v391, 0
    %v406 = vsel %vm89, %v392, 0
    %v409 = vsel %vm89, %v393, 0
    %v412 = vsel %vm89, %v394, 0
    %v415 = vsel %vm89, %v395, 0
    %417 = vmatprep.subr.bf16.mxu0 %v403
    %418 = vmatpush1.bf16.msra.mxu0 %v400
    %419 = vmatprep.subr.bf16.mxu0 0
    %420 = vmatpush1.bf16.msra.mxu0 0
    %421 = vmatprep.subr.bf16.mxu0 0
    %422 = vmatpush1.bf16.msra.mxu0 0
    %423 = vmatprep.subr.bf16.mxu0 0
    %424 = vmatpush1.bf16.msra.mxu0 0
    %425 = vmatprep.subr.bf16.mxu0 0
    %426 = vmatpush1.bf16.msra.mxu0 0
    %427 = vmatprep.subr.bf16.mxu0 0
    %428 = vmatpush1.bf16.msra.mxu0 0
    %429 = vmatprep.subr.bf16.mxu0 0
    %430 = vmatpush1.bf16.msra.mxu0 0
    %431 = vmatprep.subr.bf16.mxu0 0
    %432 = vmatpush1.bf16.msra.mxu0 0
    %433 = vmatprep.subr.bf16.mxu0 0
    %434 = vmatpush1.bf16.msra.mxu0 0
    %435 = vmatprep.subr.bf16.mxu0 0
    %436 = vmatpush1.bf16.msra.mxu0 0
    %437 = vmatprep.subr.bf16.mxu0 0
    %438 = vmatpush1.bf16.msra.mxu0 0
    %439 = vmatprep.subr.bf16.mxu0 0
    %440 = vmatpush1.bf16.msra.mxu0 0
    %441 = vmatprep.subr.bf16.mxu0 0
    %442 = vmatpush1.bf16.msra.mxu0 0
    %443 = vmatprep.subr.bf16.mxu0 0
    %444 = vmatpush1.bf16.msra.mxu0 0
    %445 = vmatprep.subr.bf16.mxu0 0
    %446 = vmatpush1.bf16.msra.mxu0 0
    %447 = vmatprep.subr.bf16.mxu0 0
    %448 = vmatpush1.bf16.msra.mxu0 0
    %449 = vmatprep.mubr.bf16.mxu0 0
    %450 = vmatmul.mubr.bf16.gmra.mrb[0].mxu0 %v397
    %v451 = vpop.f32.mrb[0].mxu0
    %v452 = vadd.f32 0.0, %v451
    %v453 = vpop.f32.mrb[0].mxu0
    %v454 = vadd.f32 0.0, %v453
    %v455 = vpop.f32.mrb[0].mxu0
    %v456 = vpop.f32.mrb[0].mxu0
    %457 = vdwg.mxu0
    %458 = vmatprep.subr.bf16.mxu0 %v409
    %459 = vmatpush1.bf16.msra.mxu0 %v406
    %460 = vmatprep.subr.bf16.mxu0 0
    %461 = vmatpush1.bf16.msra.mxu0 0
    %462 = vmatprep.subr.bf16.mxu0 0
    %463 = vmatpush1.bf16.msra.mxu0 0
    %464 = vmatprep.subr.bf16.mxu0 0
    %465 = vmatpush1.bf16.msra.mxu0 0
    %466 = vmatprep.subr.bf16.mxu0 0
    %467 = vmatpush1.bf16.msra.mxu0 0
    %468 = vmatprep.subr.bf16.mxu0 0
    %469 = vmatpush1.bf16.msra.mxu0 0
    %470 = vmatprep.subr.bf16.mxu0 0
    %471 = vmatpush1.bf16.msra.mxu0 0
    %472 = vmatprep.subr.bf16.mxu0 0
    %473 = vmatpush1.bf16.msra.mxu0 0
    %474 = vmatprep.subr.bf16.mxu0 0
    %475 = vmatpush1.bf16.msra.mxu0 0
    %476 = vmatprep.subr.bf16.mxu0 0
    %477 = vmatpush1.bf16.msra.mxu0 0
    %478 = vmatprep.subr.bf16.mxu0 0
    %479 = vmatpush1.bf16.msra.mxu0 0
    %480 = vmatprep.subr.bf16.mxu0 0
    %481 = vmatpush1.bf16.msra.mxu0 0
    %482 = vmatprep.subr.bf16.mxu0 0
    %483 = vmatpush1.bf16.msra.mxu0 0
    %484 = vmatprep.subr.bf16.mxu0 0
    %485 = vmatpush1.bf16.msra.mxu0 0
    %486 = vmatprep.subr.bf16.mxu0 0
    %487 = vmatpush1.bf16.msra.mxu0 0
    %488 = vmatprep.subr.bf16.mxu0 0
    %489 = vmatpush1.bf16.msra.mxu0 0
    %490 = vmatprep.mubr.bf16.mxu0 0
    %491 = vmatmul.mubr.bf16.gmra.mrb[0].mxu0 %v397
    %v492 = vpop.f32.mrb[0].mxu0
    %v493 = vadd.f32 0.0, %v492
    %v494 = vpop.f32.mrb[0].mxu0
    %v495 = vadd.f32 0.0, %v494
    %v496 = vpop.f32.mrb[0].mxu0
    %v497 = vpop.f32.mrb[0].mxu0
    %498 = vdwg.mxu0
    %499 = vmatprep.subr.bf16.mxu0 %v415
    %500 = vmatpush1.bf16.msra.mxu0 %v412
    %501 = vmatprep.subr.bf16.mxu0 0
    %502 = vmatpush1.bf16.msra.mxu0 0
    %503 = vmatprep.subr.bf16.mxu0 0
    %504 = vmatpush1.bf16.msra.mxu0 0
    %505 = vmatprep.subr.bf16.mxu0 0
    %506 = vmatpush1.bf16.msra.mxu0 0
    %507 = vmatprep.subr.bf16.mxu0 0
    %508 = vmatpush1.bf16.msra.mxu0 0
    %509 = vmatprep.subr.bf16.mxu0 0
    %510 = vmatpush1.bf16.msra.mxu0 0
    %511 = vmatprep.subr.bf16.mxu0 0
    %512 = vmatpush1.bf16.msra.mxu0 0
    %513 = vmatprep.subr.bf16.mxu0 0
    %514 = vmatpush1.bf16.msra.mxu0 0
    %515 = vmatprep.subr.bf16.mxu0 0
    %516 = vmatpush1.bf16.msra.mxu0 0
    %517 = vmatprep.subr.bf16.mxu0 0
    %518 = vmatpush1.bf16.msra.mxu0 0
    %519 = vmatprep.subr.bf16.mxu0 0
    %520 = vmatpush1.bf16.msra.mxu0 0
    %521 = vmatprep.subr.bf16.mxu0 0
    %522 = vmatpush1.bf16.msra.mxu0 0
    %523 = vmatprep.subr.bf16.mxu0 0
    %524 = vmatpush1.bf16.msra.mxu0 0
    %525 = vmatprep.subr.bf16.mxu0 0
    %526 = vmatpush1.bf16.msra.mxu0 0
    %527 = vmatprep.subr.bf16.mxu0 0
    %528 = vmatpush1.bf16.msra.mxu0 0
    %529 = vmatprep.subr.bf16.mxu0 0
    %530 = vmatpush1.bf16.msra.mxu0 0
    %531 = vmatprep.mubr.bf16.mxu0 0
    %532 = vmatmul.mubr.bf16.gmra.mrb[0].mxu0 %v397
    %v533 = vpop.f32.mrb[0].mxu0
    %v534 = vadd.f32 0.0, %v533
    %v535 = vpop.f32.mrb[0].mxu0
    %v536 = vadd.f32 0.0, %v535
    %v537 = vpop.f32.mrb[0].mxu0
    %v538 = vpop.f32.mrb[0].mxu0
    %539 = vdwg.mxu0
    %v540 = vadd.f32 %v287, %v452
    %v541 = vadd.f32 %v289, %v454
    %v542 = vadd.f32 %v328, %v493
    %v543 = vadd.f32 %v330, %v495
    %v544 = vadd.f32 %v369, %v534
    %v545 = vadd.f32 %v371, %v536
    %546 = vrot.lane.b32.xlu0 %v38, 110
    %v547 = vpop.permute.xlu0 %546
    %548 = vrot.lane.b32.xlu0 %v46, 110
    %v549 = vpop.permute.xlu0 %548
    %550 = vrot.lane.b32.xlu0 %v45, 110
    %v551 = vpop.permute.xlu0 %550
    %552 = vrot.lane.b32.xlu0 %v47, 110
    %v553 = vpop.permute.xlu0 %552
    %554 = vrot.lane.b32.xlu0 %v55, 110
    %v555 = vpop.permute.xlu0 %554
    %556 = vrot.lane.b32.xlu0 %v63, 110
    %v557 = vpop.permute.xlu0 %556
    %558 = vrot.lane.b32.xlu0 %v62, 110
    %v559 = vpop.permute.xlu0 %558
    %vm560 = vcmask 900096
    %v561 = vsel %vm560, %v547, %v549
    %v562 = vsel %vm560, %v549, %v551
    %v563 = vsel %vm560, %v551, %v553
    %v564 = vsel %vm560, %v553, %v555
    %v565 = vsel %vm560, %v555, %v557
    %v566 = vsel %vm560, %v557, %v559
    %v568 = vsel %vm85, %v21, 0
    %v571 = vsel %vm89, %v561, 0
    %v574 = vsel %vm89, %v562, 0
    %v577 = vsel %vm89, %v563, 0
    %v580 = vsel %vm89, %v564, 0
    %v583 = vsel %vm89, %v565, 0
    %v586 = vsel %vm89, %v566, 0
    %588 = vmatprep.subr.bf16.mxu0 %v574
    %589 = vmatpush1.bf16.msra.mxu0 %v571
    %590 = vmatprep.subr.bf16.mxu0 0
    %591 = vmatpush1.bf16.msra.mxu0 0
    %592 = vmatprep.subr.bf16.mxu0 0
    %593 = vmatpush1.bf16.msra.mxu0 0
    %594 = vmatprep.subr.bf16.mxu0 0
    %595 = vmatpush1.bf16.msra.mxu0 0
    %596 = vmatprep.subr.bf16.mxu0 0
    %597 = vmatpush1.bf16.msra.mxu0 0
    %598 = vmatprep.subr.bf16.mxu0 0
    %599 = vmatpush1.bf16.msra.mxu0 0
    %600 = vmatprep.subr.bf16.mxu0 0
    %601 = vmatpush1.bf16.msra.mxu0 0
    %602 = vmatprep.subr.bf16.mxu0 0
    %603 = vmatpush1.bf16.msra.mxu0 0
    %604 = vmatprep.subr.bf16.mxu0 0
    %605 = vmatpush1.bf16.msra.mxu0 0
    %606 = vmatprep.subr.bf16.mxu0 0
    %607 = vmatpush1.bf16.msra.mxu0 0
    %608 = vmatprep.subr.bf16.mxu0 0
    %609 = vmatpush1.bf16.msra.mxu0 0
    %610 = vmatprep.subr.bf16.mxu0 0
    %611 = vmatpush1.bf16.msra.mxu0 0
    %612 = vmatprep.subr.bf16.mxu0 0
    %613 = vmatpush1.bf16.msra.mxu0 0
    %614 = vmatprep.subr.bf16.mxu0 0
    %615 = vmatpush1.bf16.msra.mxu0 0
    %616 = vmatprep.subr.bf16.mxu0 0
    %617 = vmatpush1.bf16.msra.mxu0 0
    %618 = vmatprep.subr.bf16.mxu0 0
    %619 = vmatpush1.bf16.msra.mxu0 0
    %620 = vmatprep.mubr.bf16.mxu0 0
    %621 = vmatmul.mubr.bf16.gmra.mrb[0].mxu0 %v568
    %v622 = vpop.f32.mrb[0].mxu0
    %v623 = vadd.f32 0.0, %v622
    %v624 = vpop.f32.mrb[0].mxu0
    %v625 = vadd.f32 0.0, %v624
    %v626 = vpop.f32.mrb[0].mxu0
    %v627 = vpop.f32.mrb[0].mxu0
    %628 = vdwg.mxu0
    %629 = vmatprep.subr.bf16.mxu0 %v580
    %630 = vmatpush1.bf16.msra.mxu0 %v577
    %631 = vmatprep.subr.bf16.mxu0 0
    %632 = vmatpush1.bf16.msra.mxu0 0
    %633 = vmatprep.subr.bf16.mxu0 0
    %634 = vmatpush1.bf16.msra.mxu0 0
    %635 = vmatprep.subr.bf16.mxu0 0
    %636 = vmatpush1.bf16.msra.mxu0 0
    %637 = vmatprep.subr.bf16.mxu0 0
    %638 = vmatpush1.bf16.msra.mxu0 0
    %639 = vmatprep.subr.bf16.mxu0 0
    %640 = vmatpush1.bf16.msra.mxu0 0
    %641 = vmatprep.subr.bf16.mxu0 0
    %642 = vmatpush1.bf16.msra.mxu0 0
    %643 = vmatprep.subr.bf16.mxu0 0
    %644 = vmatpush1.bf16.msra.mxu0 0
    %645 = vmatprep.subr.bf16.mxu0 0
    %646 = vmatpush1.bf16.msra.mxu0 0
    %647 = vmatprep.subr.bf16.mxu0 0
    %648 = vmatpush1.bf16.msra.mxu0 0
    %649 = vmatprep.subr.bf16.mxu0 0
    %650 = vmatpush1.bf16.msra.mxu0 0
    %651 = vmatprep.subr.bf16.mxu0 0
    %652 = vmatpush1.bf16.msra.mxu0 0
    %653 = vmatprep.subr.bf16.mxu0 0
    %654 = vmatpush1.bf16.msra.mxu0 0
    %655 = vmatprep.subr.bf16.mxu0 0
    %656 = vmatpush1.bf16.msra.mxu0 0
    %657 = vmatprep.subr.bf16.mxu0 0
    %658 = vmatpush1.bf16.msra.mxu0 0
    %659 = vmatprep.subr.bf16.mxu0 0
    %660 = vmatpush1.bf16.msra.mxu0 0
    %661 = vmatprep.mubr.bf16.mxu0 0
    %662 = vmatmul.mubr.bf16.gmra.mrb[0].mxu0 %v568
    %v663 = vpop.f32.mrb[0].mxu0
    %v664 = vadd.f32 0.0, %v663
    %v665 = vpop.f32.mrb[0].mxu0
    %v666 = vadd.f32 0.0, %v665
    %v667 = vpop.f32.mrb[0].mxu0
    %v668 = vpop.f32.mrb[0].mxu0
    %669 = vdwg.mxu0
    %670 = vmatprep.subr.bf16.mxu0 %v586
    %671 = vmatpush1.bf16.msra.mxu0 %v583
    %672 = vmatprep.subr.bf16.mxu0 0
    %673 = vmatpush1.bf16.msra.mxu0 0
    %674 = vmatprep.subr.bf16.mxu0 0
    %675 = vmatpush1.bf16.msra.mxu0 0
    %676 = vmatprep.subr.bf16.mxu0 0
    %677 = vmatpush1.bf16.msra.mxu0 0
    %678 = vmatprep.subr.bf16.mxu0 0
    %679 = vmatpush1.bf16.msra.mxu0 0
    %680 = vmatprep.subr.bf16.mxu0 0
    %681 = vmatpush1.bf16.msra.mxu0 0
    %682 = vmatprep.subr.bf16.mxu0 0
    %683 = vmatpush1.bf16.msra.mxu0 0
    %684 = vmatprep.subr.bf16.mxu0 0
    %685 = vmatpush1.bf16.msra.mxu0 0
    %686 = vmatprep.subr.bf16.mxu0 0
    %687 = vmatpush1.bf16.msra.mxu0 0
    %688 = vmatprep.subr.bf16.mxu0 0
    %689 = vmatpush1.bf16.msra.mxu0 0
    %690 = vmatprep.subr.bf16.mxu0 0
    %691 = vmatpush1.bf16.msra.mxu0 0
    %692 = vmatprep.subr.bf16.mxu0 0
    %693 = vmatpush1.bf16.msra.mxu0 0
    %694 = vmatprep.subr.bf16.mxu0 0
    %695 = vmatpush1.bf16.msra.mxu0 0
    %696 = vmatprep.subr.bf16.mxu0 0
    %697 = vmatpush1.bf16.msra.mxu0 0
    %698 = vmatprep.subr.bf16.mxu0 0
    %699 = vmatpush1.bf16.msra.mxu0 0
    %700 = vmatprep.subr.bf16.mxu0 0
    %701 = vmatpush1.bf16.msra.mxu0 0
    %702 = vmatprep.mubr.bf16.mxu0 0
    %703 = vmatmul.mubr.bf16.gmra.mrb[0].mxu0 %v568
    %v704 = vpop.f32.mrb[0].mxu0
    %v705 = vadd.f32 0.0, %v704
    %v706 = vpop.f32.mrb[0].mxu0
    %v707 = vadd.f32 0.0, %v706
    %v708 = vpop.f32.mrb[0].mxu0
    %v709 = vpop.f32.mrb[0].mxu0
    %710 = vdwg.mxu0
    %v711 = vadd.f32 %v540, %v623
    %v712 = vadd.f32 %v541, %v625
    %v713 = vadd.f32 %v542, %v664
    %v714 = vadd.f32 %v543, %v666
    %v715 = vadd.f32 %v544, %v705
    %v716 = vadd.f32 %v545, %v707
    %717 = vrot.lane.b32.xlu0 %v38, 109
    %v718 = vpop.permute.xlu0 %717
    %719 = vrot.lane.b32.xlu0 %v46, 109
    %v720 = vpop.permute.xlu0 %719
    %721 = vrot.lane.b32.xlu0 %v45, 109
    %v722 = vpop.permute.xlu0 %721
    %723 = vrot.lane.b32.xlu0 %v47, 109
    %v724 = vpop.permute.xlu0 %723
    %725 = vrot.lane.b32.xlu0 %v55, 109
    %v726 = vpop.permute.xlu0 %725
    %727 = vrot.lane.b32.xlu0 %v63, 109
    %v728 = vpop.permute.xlu0 %727
    %729 = vrot.lane.b32.xlu0 %v62, 109
    %v730 = vpop.permute.xlu0 %729
    %vm731 = vcmask 891904
    %v732 = vsel %vm731, %v718, %v720
    %v733 = vsel %vm731, %v720, %v722
    %v734 = vsel %vm731, %v722, %v724
    %v735 = vsel %vm731, %v724, %v726
    %v736 = vsel %vm731, %v726, %v728
    %v737 = vsel %vm731, %v728, %v730
    %v739 = vsel %vm85, %v22, 0
    %v742 = vsel %vm89, %v732, 0
    %v745 = vsel %vm89, %v733, 0
    %v748 = vsel %vm89, %v734, 0
    %v751 = vsel %vm89, %v735, 0
    %v754 = vsel %vm89, %v736, 0
    %v757 = vsel %vm89, %v737, 0
    %759 = vmatprep.subr.bf16.mxu0 %v745
    %760 = vmatpush1.bf16.msra.mxu0 %v742
    %761 = vmatprep.subr.bf16.mxu0 0
    %762 = vmatpush1.bf16.msra.mxu0 0
    %763 = vmatprep.subr.bf16.mxu0 0
    %764 = vmatpush1.bf16.msra.mxu0 0
    %765 = vmatprep.subr.bf16.mxu0 0
    %766 = vmatpush1.bf16.msra.mxu0 0
    %767 = vmatprep.subr.bf16.mxu0 0
    %768 = vmatpush1.bf16.msra.mxu0 0
    %769 = vmatprep.subr.bf16.mxu0 0
    %770 = vmatpush1.bf16.msra.mxu0 0
    %771 = vmatprep.subr.bf16.mxu0 0
    %772 = vmatpush1.bf16.msra.mxu0 0
    %773 = vmatprep.subr.bf16.mxu0 0
    %774 = vmatpush1.bf16.msra.mxu0 0
    %775 = vmatprep.subr.bf16.mxu0 0
    %776 = vmatpush1.bf16.msra.mxu0 0
    %777 = vmatprep.subr.bf16.mxu0 0
    %778 = vmatpush1.bf16.msra.mxu0 0
    %779 = vmatprep.subr.bf16.mxu0 0
    %780 = vmatpush1.bf16.msra.mxu0 0
    %781 = vmatprep.subr.bf16.mxu0 0
    %782 = vmatpush1.bf16.msra.mxu0 0
    %783 = vmatprep.subr.bf16.mxu0 0
    %784 = vmatpush1.bf16.msra.mxu0 0
    %785 = vmatprep.subr.bf16.mxu0 0
    %786 = vmatpush1.bf16.msra.mxu0 0
    %787 = vmatprep.subr.bf16.mxu0 0
    %788 = vmatpush1.bf16.msra.mxu0 0
    %789 = vmatprep.subr.bf16.mxu0 0
    %790 = vmatpush1.bf16.msra.mxu0 0
    %791 = vmatprep.mubr.bf16.mxu0 0
    %792 = vmatmul.mubr.bf16.gmra.mrb[0].mxu0 %v739
    %v793 = vpop.f32.mrb[0].mxu0
    %v794 = vadd.f32 0.0, %v793
    %v795 = vpop.f32.mrb[0].mxu0
    %v796 = vadd.f32 0.0, %v795
    %v797 = vpop.f32.mrb[0].mxu0
    %v798 = vpop.f32.mrb[0].mxu0
    %799 = vdwg.mxu0
    %800 = vmatprep.subr.bf16.mxu0 %v751
    %801 = vmatpush1.bf16.msra.mxu0 %v748
    %802 = vmatprep.subr.bf16.mxu0 0
    %803 = vmatpush1.bf16.msra.mxu0 0
    %804 = vmatprep.subr.bf16.mxu0 0
    %805 = vmatpush1.bf16.msra.mxu0 0
    %806 = vmatprep.subr.bf16.mxu0 0
    %807 = vmatpush1.bf16.msra.mxu0 0
    %808 = vmatprep.subr.bf16.mxu0 0
    %809 = vmatpush1.bf16.msra.mxu0 0
    %810 = vmatprep.subr.bf16.mxu0 0
    %811 = vmatpush1.bf16.msra.mxu0 0
    %812 = vmatprep.subr.bf16.mxu0 0
    %813 = vmatpush1.bf16.msra.mxu0 0
    %814 = vmatprep.subr.bf16.mxu0 0
    %815 = vmatpush1.bf16.msra.mxu0 0
    %816 = vmatprep.subr.bf16.mxu0 0
    %817 = vmatpush1.bf16.msra.mxu0 0
    %818 = vmatprep.subr.bf16.mxu0 0
    %819 = vmatpush1.bf16.msra.mxu0 0
    %820 = vmatprep.subr.bf16.mxu0 0
    %821 = vmatpush1.bf16.msra.mxu0 0
    %822 = vmatprep.subr.bf16.mxu0 0
    %823 = vmatpush1.bf16.msra.mxu0 0
    %824 = vmatprep.subr.bf16.mxu0 0
    %825 = vmatpush1.bf16.msra.mxu0 0
    %826 = vmatprep.subr.bf16.mxu0 0
    %827 = vmatpush1.bf16.msra.mxu0 0
    %828 = vmatprep.subr.bf16.mxu0 0
    %829 = vmatpush1.bf16.msra.mxu0 0
    %830 = vmatprep.subr.bf16.mxu0 0
    %831 = vmatpush1.bf16.msra.mxu0 0
    %832 = vmatprep.mubr.bf16.mxu0 0
    %833 = vmatmul.mubr.bf16.gmra.mrb[0].mxu0 %v739
    %v834 = vpop.f32.mrb[0].mxu0
    %v835 = vadd.f32 0.0, %v834
    %v836 = vpop.f32.mrb[0].mxu0
    %v837 = vadd.f32 0.0, %v836
    %v838 = vpop.f32.mrb[0].mxu0
    %v839 = vpop.f32.mrb[0].mxu0
    %840 = vdwg.mxu0
    %841 = vmatprep.subr.bf16.mxu0 %v757
    %842 = vmatpush1.bf16.msra.mxu0 %v754
    %843 = vmatprep.subr.bf16.mxu0 0
    %844 = vmatpush1.bf16.msra.mxu0 0
    %845 = vmatprep.subr.bf16.mxu0 0
    %846 = vmatpush1.bf16.msra.mxu0 0
    %847 = vmatprep.subr.bf16.mxu0 0
    %848 = vmatpush1.bf16.msra.mxu0 0
    %849 = vmatprep.subr.bf16.mxu0 0
    %850 = vmatpush1.bf16.msra.mxu0 0
    %851 = vmatprep.subr.bf16.mxu0 0
    %852 = vmatpush1.bf16.msra.mxu0 0
    %853 = vmatprep.subr.bf16.mxu0 0
    %854 = vmatpush1.bf16.msra.mxu0 0
    %855 = vmatprep.subr.bf16.mxu0 0
    %856 = vmatpush1.bf16.msra.mxu0 0
    %857 = vmatprep.subr.bf16.mxu0 0
    %858 = vmatpush1.bf16.msra.mxu0 0
    %859 = vmatprep.subr.bf16.mxu0 0
    %860 = vmatpush1.bf16.msra.mxu0 0
    %861 = vmatprep.subr.bf16.mxu0 0
    %862 = vmatpush1.bf16.msra.mxu0 0
    %863 = vmatprep.subr.bf16.mxu0 0
    %864 = vmatpush1.bf16.msra.mxu0 0
    %865 = vmatprep.subr.bf16.mxu0 0
    %866 = vmatpush1.bf16.msra.mxu0 0
    %867 = vmatprep.subr.bf16.mxu0 0
    %868 = vmatpush1.bf16.msra.mxu0 0
    %869 = vmatprep.subr.bf16.mxu0 0
    %870 = vmatpush1.bf16.msra.mxu0 0
    %871 = vmatprep.subr.bf16.mxu0 0
    %872 = vmatpush1.bf16.msra.mxu0 0
    %873 = vmatprep.mubr.bf16.mxu0 0
    %874 = vmatmul.mubr.bf16.gmra.mrb[0].mxu0 %v739
    %v875 = vpop.f32.mrb[0].mxu0
    %v876 = vadd.f32 0.0, %v875
    %v877 = vpop.f32.mrb[0].mxu0
    %v878 = vadd.f32 0.0, %v877
    %v879 = vpop.f32.mrb[0].mxu0
    %v880 = vpop.f32.mrb[0].mxu0
    %881 = vdwg.mxu0
    %v882 = vadd.f32 %v711, %v794
    %v883 = vadd.f32 %v712, %v796
    %v884 = vadd.f32 %v713, %v835
    %v885 = vadd.f32 %v714, %v837
    %v886 = vadd.f32 %v715, %v876
    %v887 = vadd.f32 %v716, %v878
    %888 = vrot.lane.b32.xlu0 %v38, 108
    %v889 = vpop.permute.xlu0 %888
    %890 = vrot.lane.b32.xlu0 %v46, 108
    %v891 = vpop.permute.xlu0 %890
    %892 = vrot.lane.b32.xlu0 %v45, 108
    %v893 = vpop.permute.xlu0 %892
    %894 = vrot.lane.b32.xlu0 %v47, 108
    %v895 = vpop.permute.xlu0 %894
    %896 = vrot.lane.b32.xlu0 %v55, 108
    %v897 = vpop.permute.xlu0 %896
    %898 = vrot.lane.b32.xlu0 %v63, 108
    %v899 = vpop.permute.xlu0 %898
    %900 = vrot.lane.b32.xlu0 %v62, 108
    %v901 = vpop.permute.xlu0 %900
    %vm902 = vcmask 883712
    %v903 = vsel %vm902, %v889, %v891
    %v904 = vsel %vm902, %v891, %v893
    %v905 = vsel %vm902, %v893, %v895
    %v906 = vsel %vm902, %v895, %v897
    %v907 = vsel %vm902, %v897, %v899
    %v908 = vsel %vm902, %v899, %v901
    %v910 = vsel %vm85, %v23, 0
    %v913 = vsel %vm89, %v903, 0
    %v916 = vsel %vm89, %v904, 0
    %v919 = vsel %vm89, %v905, 0
    %v922 = vsel %vm89, %v906, 0
    %v925 = vsel %vm89, %v907, 0
    %v928 = vsel %vm89, %v908, 0
    %930 = vmatprep.subr.bf16.mxu0 %v916
    %931 = vmatpush1.bf16.msra.mxu0 %v913
    %932 = vmatprep.subr.bf16.mxu0 0
    %933 = vmatpush1.bf16.msra.mxu0 0
    %934 = vmatprep.subr.bf16.mxu0 0
    %935 = vmatpush1.bf16.msra.mxu0 0
    %936 = vmatprep.subr.bf16.mxu0 0
    %937 = vmatpush1.bf16.msra.mxu0 0
    %938 = vmatprep.subr.bf16.mxu0 0
    %939 = vmatpush1.bf16.msra.mxu0 0
    %940 = vmatprep.subr.bf16.mxu0 0
    %941 = vmatpush1.bf16.msra.mxu0 0
    %942 = vmatprep.subr.bf16.mxu0 0
    %943 = vmatpush1.bf16.msra.mxu0 0
    %944 = vmatprep.subr.bf16.mxu0 0
    %945 = vmatpush1.bf16.msra.mxu0 0
    %946 = vmatprep.subr.bf16.mxu0 0
    %947 = vmatpush1.bf16.msra.mxu0 0
    %948 = vmatprep.subr.bf16.mxu0 0
    %949 = vmatpush1.bf16.msra.mxu0 0
    %950 = vmatprep.subr.bf16.mxu0 0
    %951 = vmatpush1.bf16.msra.mxu0 0
    %952 = vmatprep.subr.bf16.mxu0 0
    %953 = vmatpush1.bf16.msra.mxu0 0
    %954 = vmatprep.subr.bf16.mxu0 0
    %955 = vmatpush1.bf16.msra.mxu0 0
    %956 = vmatprep.subr.bf16.mxu0 0
    %957 = vmatpush1.bf16.msra.mxu0 0
    %958 = vmatprep.subr.bf16.mxu0 0
    %959 = vmatpush1.bf16.msra.mxu0 0
    %960 = vmatprep.subr.bf16.mxu0 0
    %961 = vmatpush1.bf16.msra.mxu0 0
    %962 = vmatprep.mubr.bf16.mxu0 0
    %963 = vmatmul.mubr.bf16.gmra.mrb[0].mxu0 %v910
    %v964 = vpop.f32.mrb[0].mxu0
    %v965 = vadd.f32 0.0, %v964
    %v966 = vpop.f32.mrb[0].mxu0
    %v967 = vadd.f32 0.0, %v966
    %v968 = vpop.f32.mrb[0].mxu0
    %v969 = vpop.f32.mrb[0].mxu0
    %970 = vdwg.mxu0
    %971 = vmatprep.subr.bf16.mxu0 %v922
    %972 = vmatpush1.bf16.msra.mxu0 %v919
    %973 = vmatprep.subr.bf16.mxu0 0
    %974 = vmatpush1.bf16.msra.mxu0 0
    %975 = vmatprep.subr.bf16.mxu0 0
    %976 = vmatpush1.bf16.msra.mxu0 0
    %977 = vmatprep.subr.bf16.mxu0 0
    %978 = vmatpush1.bf16.msra.mxu0 0
    %979 = vmatprep.subr.bf16.mxu0 0
    %980 = vmatpush1.bf16.msra.mxu0 0
    %981 = vmatprep.subr.bf16.mxu0 0
    %982 = vmatpush1.bf16.msra.mxu0 0
    %983 = vmatprep.subr.bf16.mxu0 0
    %984 = vmatpush1.bf16.msra.mxu0 0
    %985 = vmatprep.subr.bf16.mxu0 0
    %986 = vmatpush1.bf16.msra.mxu0 0
    %987 = vmatprep.subr.bf16.mxu0 0
    %988 = vmatpush1.bf16.msra.mxu0 0
    %989 = vmatprep.subr.bf16.mxu0 0
    %990 = vmatpush1.bf16.msra.mxu0 0
    %991 = vmatprep.subr.bf16.mxu0 0
    %992 = vmatpush1.bf16.msra.mxu0 0
    %993 = vmatprep.subr.bf16.mxu0 0
    %994 = vmatpush1.bf16.msra.mxu0 0
    %995 = vmatprep.subr.bf16.mxu0 0
    %996 = vmatpush1.bf16.msra.mxu0 0
    %997 = vmatprep.subr.bf16.mxu0 0
    %998 = vmatpush1.bf16.msra.mxu0 0
    %999 = vmatprep.subr.bf16.mxu0 0
    %1000 = vmatpush1.bf16.msra.mxu0 0
    %1001 = vmatprep.subr.bf16.mxu0 0
    %1002 = vmatpush1.bf16.msra.mxu0 0
    %1003 = vmatprep.mubr.bf16.mxu0 0
    %1004 = vmatmul.mubr.bf16.gmra.mrb[0].mxu0 %v910
    %v1005 = vpop.f32.mrb[0].mxu0
    %v1006 = vadd.f32 0.0, %v1005
    %v1007 = vpop.f32.mrb[0].mxu0
    %v1008 = vadd.f32 0.0, %v1007
    %v1009 = vpop.f32.mrb[0].mxu0
    %v1010 = vpop.f32.mrb[0].mxu0
    %1011 = vdwg.mxu0
    %1012 = vmatprep.subr.bf16.mxu0 %v928
    %1013 = vmatpush1.bf16.msra.mxu0 %v925
    %1014 = vmatprep.subr.bf16.mxu0 0
    %1015 = vmatpush1.bf16.msra.mxu0 0
    %1016 = vmatprep.subr.bf16.mxu0 0
    %1017 = vmatpush1.bf16.msra.mxu0 0
    %1018 = vmatprep.subr.bf16.mxu0 0
    %1019 = vmatpush1.bf16.msra.mxu0 0
    %1020 = vmatprep.subr.bf16.mxu0 0
    %1021 = vmatpush1.bf16.msra.mxu0 0
    %1022 = vmatprep.subr.bf16.mxu0 0
    %1023 = vmatpush1.bf16.msra.mxu0 0
    %1024 = vmatprep.subr.bf16.mxu0 0
    %1025 = vmatpush1.bf16.msra.mxu0 0
    %1026 = vmatprep.subr.bf16.mxu0 0
    %1027 = vmatpush1.bf16.msra.mxu0 0
    %1028 = vmatprep.subr.bf16.mxu0 0
    %1029 = vmatpush1.bf16.msra.mxu0 0
    %1030 = vmatprep.subr.bf16.mxu0 0
    %1031 = vmatpush1.bf16.msra.mxu0 0
    %1032 = vmatprep.subr.bf16.mxu0 0
    %1033 = vmatpush1.bf16.msra.mxu0 0
    %1034 = vmatprep.subr.bf16.mxu0 0
    %1035 = vmatpush1.bf16.msra.mxu0 0
    %1036 = vmatprep.subr.bf16.mxu0 0
    %1037 = vmatpush1.bf16.msra.mxu0 0
    %1038 = vmatprep.subr.bf16.mxu0 0
    %1039 = vmatpush1.bf16.msra.mxu0 0
    %1040 = vmatprep.subr.bf16.mxu0 0
    %1041 = vmatpush1.bf16.msra.mxu0 0
    %1042 = vmatprep.subr.bf16.mxu0 0
    %1043 = vmatpush1.bf16.msra.mxu0 0
    %1044 = vmatprep.mubr.bf16.mxu0 0
    %1045 = vmatmul.mubr.bf16.gmra.mrb[0].mxu0 %v910
    %v1046 = vpop.f32.mrb[0].mxu0
    %v1047 = vadd.f32 0.0, %v1046
    %v1048 = vpop.f32.mrb[0].mxu0
    %v1049 = vadd.f32 0.0, %v1048
    %v1050 = vpop.f32.mrb[0].mxu0
    %v1051 = vpop.f32.mrb[0].mxu0
    %1052 = vdwg.mxu0
    %v1053 = vadd.f32 %v882, %v965
    %v1054 = vadd.f32 %v883, %v967
    %v1055 = vadd.f32 %v884, %v1006
    %v1056 = vadd.f32 %v885, %v1008
    %v1057 = vadd.f32 %v886, %v1047
    %v1058 = vadd.f32 %v887, %v1049
    %1059 = vrot.lane.b32.xlu0 %v38, 92
    %v1060 = vpop.permute.xlu0 %1059
    %1061 = vrot.lane.b32.xlu0 %v46, 92
    %v1062 = vpop.permute.xlu0 %1061
    %1063 = vrot.lane.b32.xlu0 %v45, 92
    %v1064 = vpop.permute.xlu0 %1063
    %1065 = vrot.lane.b32.xlu0 %v47, 92
    %v1066 = vpop.permute.xlu0 %1065
    %1067 = vrot.lane.b32.xlu0 %v55, 92
    %v1068 = vpop.permute.xlu0 %1067
    %1069 = vrot.lane.b32.xlu0 %v63, 92
    %v1070 = vpop.permute.xlu0 %1069
    %1071 = vrot.lane.b32.xlu0 %v62, 92
    %v1072 = vpop.permute.xlu0 %1071
    %vm1073 = vcmask 752640
    %v1074 = vsel %vm1073, %v1060, %v1062
    %v1075 = vsel %vm1073, %v1062, %v1064
    %v1076 = vsel %vm1073, %v1064, %v1066
    %v1077 = vsel %vm1073, %v1066, %v1068
    %v1078 = vsel %vm1073, %v1068, %v1070
    %v1079 = vsel %vm1073, %v1070, %v1072
    %v1081 = vsel %vm85, %v24, 0
    %v1084 = vsel %vm89, %v1074, 0
    %v1087 = vsel %vm89, %v1075, 0
    %v1090 = vsel %vm89, %v1076, 0
    %v1093 = vsel %vm89, %v1077, 0
    %v1096 = vsel %vm89, %v1078, 0
    %v1099 = vsel %vm89, %v1079, 0
    %1101 = vmatprep.subr.bf16.mxu0 %v1087
    %1102 = vmatpush1.bf16.msra.mxu0 %v1084
    %1103 = vmatprep.subr.bf16.mxu0 0
    %1104 = vmatpush1.bf16.msra.mxu0 0
    %1105 = vmatprep.subr.bf16.mxu0 0
    %1106 = vmatpush1.bf16.msra.mxu0 0
    %1107 = vmatprep.subr.bf16.mxu0 0
    %1108 = vmatpush1.bf16.msra.mxu0 0
    %1109 = vmatprep.subr.bf16.mxu0 0
    %1110 = vmatpush1.bf16.msra.mxu0 0
    %1111 = vmatprep.subr.bf16.mxu0 0
    %1112 = vmatpush1.bf16.msra.mxu0 0
    %1113 = vmatprep.subr.bf16.mxu0 0
    %1114 = vmatpush1.bf16.msra.mxu0 0
    %1115 = vmatprep.subr.bf16.mxu0 0
    %1116 = vmatpush1.bf16.msra.mxu0 0
    %1117 = vmatprep.subr.bf16.mxu0 0
    %1118 = vmatpush1.bf16.msra.mxu0 0
    %1119 = vmatprep.subr.bf16.mxu0 0
    %1120 = vmatpush1.bf16.msra.mxu0 0
    %1121 = vmatprep.subr.bf16.mxu0 0
    %1122 = vmatpush1.bf16.msra.mxu0 0
    %1123 = vmatprep.subr.bf16.mxu0 0
    %1124 = vmatpush1.bf16.msra.mxu0 0
    %1125 = vmatprep.subr.bf16.mxu0 0
    %1126 = vmatpush1.bf16.msra.mxu0 0
    %1127 = vmatprep.subr.bf16.mxu0 0
    %1128 = vmatpush1.bf16.msra.mxu0 0
    %1129 = vmatprep.subr.bf16.mxu0 0
    %1130 = vmatpush1.bf16.msra.mxu0 0
    %1131 = vmatprep.subr.bf16.mxu0 0
    %1132 = vmatpush1.bf16.msra.mxu0 0
    %1133 = vmatprep.mubr.bf16.mxu0 0
    %1134 = vmatmul.mubr.bf16.gmra.mrb[0].mxu0 %v1081
    %v1135 = vpop.f32.mrb[0].mxu0
    %v1136 = vadd.f32 0.0, %v1135
    %v1137 = vpop.f32.mrb[0].mxu0
    %v1138 = vadd.f32 0.0, %v1137
    %v1139 = vpop.f32.mrb[0].mxu0
    %v1140 = vpop.f32.mrb[0].mxu0
    %1141 = vdwg.mxu0
    %1142 = vmatprep.subr.bf16.mxu0 %v1093
    %1143 = vmatpush1.bf16.msra.mxu0 %v1090
    %1144 = vmatprep.subr.bf16.mxu0 0
    %1145 = vmatpush1.bf16.msra.mxu0 0
    %1146 = vmatprep.subr.bf16.mxu0 0
    %1147 = vmatpush1.bf16.msra.mxu0 0
    %1148 = vmatprep.subr.bf16.mxu0 0
    %1149 = vmatpush1.bf16.msra.mxu0 0
    %1150 = vmatprep.subr.bf16.mxu0 0
    %1151 = vmatpush1.bf16.msra.mxu0 0
    %1152 = vmatprep.subr.bf16.mxu0 0
    %1153 = vmatpush1.bf16.msra.mxu0 0
    %1154 = vmatprep.subr.bf16.mxu0 0
    %1155 = vmatpush1.bf16.msra.mxu0 0
    %1156 = vmatprep.subr.bf16.mxu0 0
    %1157 = vmatpush1.bf16.msra.mxu0 0
    %1158 = vmatprep.subr.bf16.mxu0 0
    %1159 = vmatpush1.bf16.msra.mxu0 0
    %1160 = vmatprep.subr.bf16.mxu0 0
    %1161 = vmatpush1.bf16.msra.mxu0 0
    %1162 = vmatprep.subr.bf16.mxu0 0
    %1163 = vmatpush1.bf16.msra.mxu0 0
    %1164 = vmatprep.subr.bf16.mxu0 0
    %1165 = vmatpush1.bf16.msra.mxu0 0
    %1166 = vmatprep.subr.bf16.mxu0 0
    %1167 = vmatpush1.bf16.msra.mxu0 0
    %1168 = vmatprep.subr.bf16.mxu0 0
    %1169 = vmatpush1.bf16.msra.mxu0 0
    %1170 = vmatprep.subr.bf16.mxu0 0
    %1171 = vmatpush1.bf16.msra.mxu0 0
    %1172 = vmatprep.subr.bf16.mxu0 0
    %1173 = vmatpush1.bf16.msra.mxu0 0
    %1174 = vmatprep.mubr.bf16.mxu0 0
    %1175 = vmatmul.mubr.bf16.gmra.mrb[0].mxu0 %v1081
    %v1176 = vpop.f32.mrb[0].mxu0
    %v1177 = vadd.f32 0.0, %v1176
    %v1178 = vpop.f32.mrb[0].mxu0
    %v1179 = vadd.f32 0.0, %v1178
    %v1180 = vpop.f32.mrb[0].mxu0
    %v1181 = vpop.f32.mrb[0].mxu0
    %1182 = vdwg.mxu0
    %1183 = vmatprep.subr.bf16.mxu0 %v1099
    %1184 = vmatpush1.bf16.msra.mxu0 %v1096
    %1185 = vmatprep.subr.bf16.mxu0 0
    %1186 = vmatpush1.bf16.msra.mxu0 0
    %1187 = vmatprep.subr.bf16.mxu0 0
    %1188 = vmatpush1.bf16.msra.mxu0 0
    %1189 = vmatprep.subr.bf16.mxu0 0
    %1190 = vmatpush1.bf16.msra.mxu0 0
    %1191 = vmatprep.subr.bf16.mxu0 0
    %1192 = vmatpush1.bf16.msra.mxu0 0
    %1193 = vmatprep.subr.bf16.mxu0 0
    %1194 = vmatpush1.bf16.msra.mxu0 0
    %1195 = vmatprep.subr.bf16.mxu0 0
    %1196 = vmatpush1.bf16.msra.mxu0 0
    %1197 = vmatprep.subr.bf16.mxu0 0
    %1198 = vmatpush1.bf16.msra.mxu0 0
    %1199 = vmatprep.subr.bf16.mxu0 0
    %1200 = vmatpush1.bf16.msra.mxu0 0
    %1201 = vmatprep.subr.bf16.mxu0 0
    %1202 = vmatpush1.bf16.msra.mxu0 0
    %1203 = vmatprep.subr.bf16.mxu0 0
    %1204 = vmatpush1.bf16.msra.mxu0 0
    %1205 = vmatprep.subr.bf16.mxu0 0
    %1206 = vmatpush1.bf16.msra.mxu0 0
    %1207 = vmatprep.subr.bf16.mxu0 0
    %1208 = vmatpush1.bf16.msra.mxu0 0
    %1209 = vmatprep.subr.bf16.mxu0 0
    %1210 = vmatpush1.bf16.msra.mxu0 0
    %1211 = vmatprep.subr.bf16.mxu0 0
    %1212 = vmatpush1.bf16.msra.mxu0 0
    %1213 = vmatprep.subr.bf16.mxu0 0
    %1214 = vmatpush1.bf16.msra.mxu0 0
    %1215 = vmatprep.mubr.bf16.mxu0 0
    %1216 = vmatmul.mubr.bf16.gmra.mrb[0].mxu0 %v1081
    %v1217 = vpop.f32.mrb[0].mxu0
    %v1218 = vadd.f32 0.0, %v1217
    %v1219 = vpop.f32.mrb[0].mxu0
    %v1220 = vadd.f32 0.0, %v1219
    %v1221 = vpop.f32.mrb[0].mxu0
    %v1222 = vpop.f32.mrb[0].mxu0
    %1223 = vdwg.mxu0
    %v1224 = vadd.f32 %v1053, %v1136
    %v1225 = vadd.f32 %v1054, %v1138
    %v1226 = vadd.f32 %v1055, %v1177
    %v1227 = vadd.f32 %v1056, %v1179
    %v1228 = vadd.f32 %v1057, %v1218
    %v1229 = vadd.f32 %v1058, %v1220
    %1230 = vrot.lane.b32.xlu0 %v38, 91
    %v1231 = vpop.permute.xlu0 %1230
    %1232 = vrot.lane.b32.xlu0 %v46, 91
    %v1233 = vpop.permute.xlu0 %1232
    %1234 = vrot.lane.b32.xlu0 %v45, 91
    %v1235 = vpop.permute.xlu0 %1234
    %1236 = vrot.lane.b32.xlu0 %v47, 91
    %v1237 = vpop.permute.xlu0 %1236
    %1238 = vrot.lane.b32.xlu0 %v55, 91
    %v1239 = vpop.permute.xlu0 %1238
    %1240 = vrot.lane.b32.xlu0 %v63, 91
    %v1241 = vpop.permute.xlu0 %1240
    %1242 = vrot.lane.b32.xlu0 %v62, 91
    %v1243 = vpop.permute.xlu0 %1242
    %vm1244 = vcmask 744448
    %v1245 = vsel %vm1244, %v1231, %v1233
    %v1246 = vsel %vm1244, %v1233, %v1235
    %v1247 = vsel %vm1244, %v1235, %v1237
    %v1248 = vsel %vm1244, %v1237, %v1239
    %v1249 = vsel %vm1244, %v1239, %v1241
    %v1250 = vsel %vm1244, %v1241, %v1243
    %v1252 = vsel %vm85, %v25, 0
    %v1255 = vsel %vm89, %v1245, 0
    %v1258 = vsel %vm89, %v1246, 0
    %v1261 = vsel %vm89, %v1247, 0
    %v1264 = vsel %vm89, %v1248, 0
    %v1267 = vsel %vm89, %v1249, 0
    %v1270 = vsel %vm89, %v1250, 0
    %1272 = vmatprep.subr.bf16.mxu0 %v1258
    %1273 = vmatpush1.bf16.msra.mxu0 %v1255
    %1274 = vmatprep.subr.bf16.mxu0 0
    %1275 = vmatpush1.bf16.msra.mxu0 0
    %1276 = vmatprep.subr.bf16.mxu0 0
    %1277 = vmatpush1.bf16.msra.mxu0 0
    %1278 = vmatprep.subr.bf16.mxu0 0
    %1279 = vmatpush1.bf16.msra.mxu0 0
    %1280 = vmatprep.subr.bf16.mxu0 0
    %1281 = vmatpush1.bf16.msra.mxu0 0
    %1282 = vmatprep.subr.bf16.mxu0 0
    %1283 = vmatpush1.bf16.msra.mxu0 0
    %1284 = vmatprep.subr.bf16.mxu0 0
    %1285 = vmatpush1.bf16.msra.mxu0 0
    %1286 = vmatprep.subr.bf16.mxu0 0
    %1287 = vmatpush1.bf16.msra.mxu0 0
    %1288 = vmatprep.subr.bf16.mxu0 0
    %1289 = vmatpush1.bf16.msra.mxu0 0
    %1290 = vmatprep.subr.bf16.mxu0 0
    %1291 = vmatpush1.bf16.msra.mxu0 0
    %1292 = vmatprep.subr.bf16.mxu0 0
    %1293 = vmatpush1.bf16.msra.mxu0 0
    %1294 = vmatprep.subr.bf16.mxu0 0
    %1295 = vmatpush1.bf16.msra.mxu0 0
    %1296 = vmatprep.subr.bf16.mxu0 0
    %1297 = vmatpush1.bf16.msra.mxu0 0
    %1298 = vmatprep.subr.bf16.mxu0 0
    %1299 = vmatpush1.bf16.msra.mxu0 0
    %1300 = vmatprep.subr.bf16.mxu0 0
    %1301 = vmatpush1.bf16.msra.mxu0 0
    %1302 = vmatprep.subr.bf16.mxu0 0
    %1303 = vmatpush1.bf16.msra.mxu0 0
    %1304 = vmatprep.mubr.bf16.mxu0 0
    %1305 = vmatmul.mubr.bf16.gmra.mrb[0].mxu0 %v1252
    %v1306 = vpop.f32.mrb[0].mxu0
    %v1307 = vadd.f32 0.0, %v1306
    %v1308 = vpop.f32.mrb[0].mxu0
    %v1309 = vadd.f32 0.0, %v1308
    %v1310 = vpop.f32.mrb[0].mxu0
    %v1311 = vpop.f32.mrb[0].mxu0
    %1312 = vdwg.mxu0
    %1313 = vmatprep.subr.bf16.mxu0 %v1264
    %1314 = vmatpush1.bf16.msra.mxu0 %v1261
    %1315 = vmatprep.subr.bf16.mxu0 0
    %1316 = vmatpush1.bf16.msra.mxu0 0
    %1317 = vmatprep.subr.bf16.mxu0 0
    %1318 = vmatpush1.bf16.msra.mxu0 0
    %1319 = vmatprep.subr.bf16.mxu0 0
    %1320 = vmatpush1.bf16.msra.mxu0 0
    %1321 = vmatprep.subr.bf16.mxu0 0
    %1322 = vmatpush1.bf16.msra.mxu0 0
    %1323 = vmatprep.subr.bf16.mxu0 0
    %1324 = vmatpush1.bf16.msra.mxu0 0
    %1325 = vmatprep.subr.bf16.mxu0 0
    %1326 = vmatpush1.bf16.msra.mxu0 0
    %1327 = vmatprep.subr.bf16.mxu0 0
    %1328 = vmatpush1.bf16.msra.mxu0 0
    %1329 = vmatprep.subr.bf16.mxu0 0
    %1330 = vmatpush1.bf16.msra.mxu0 0
    %1331 = vmatprep.subr.bf16.mxu0 0
    %1332 = vmatpush1.bf16.msra.mxu0 0
    %1333 = vmatprep.subr.bf16.mxu0 0
    %1334 = vmatpush1.bf16.msra.mxu0 0
    %1335 = vmatprep.subr.bf16.mxu0 0
    %1336 = vmatpush1.bf16.msra.mxu0 0
    %1337 = vmatprep.subr.bf16.mxu0 0
    %1338 = vmatpush1.bf16.msra.mxu0 0
    %1339 = vmatprep.subr.bf16.mxu0 0
    %1340 = vmatpush1.bf16.msra.mxu0 0
    %1341 = vmatprep.subr.bf16.mxu0 0
    %1342 = vmatpush1.bf16.msra.mxu0 0
    %1343 = vmatprep.subr.bf16.mxu0 0
    %1344 = vmatpush1.bf16.msra.mxu0 0
    %1345 = vmatprep.mubr.bf16.mxu0 0
    %1346 = vmatmul.mubr.bf16.gmra.mrb[0].mxu0 %v1252
    %v1347 = vpop.f32.mrb[0].mxu0
    %v1348 = vadd.f32 0.0, %v1347
    %v1349 = vpop.f32.mrb[0].mxu0
    %v1350 = vadd.f32 0.0, %v1349
    %v1351 = vpop.f32.mrb[0].mxu0
    %v1352 = vpop.f32.mrb[0].mxu0
    %1353 = vdwg.mxu0
    %1354 = vmatprep.subr.bf16.mxu0 %v1270
    %1355 = vmatpush1.bf16.msra.mxu0 %v1267
    %1356 = vmatprep.subr.bf16.mxu0 0
    %1357 = vmatpush1.bf16.msra.mxu0 0
    %1358 = vmatprep.subr.bf16.mxu0 0
    %1359 = vmatpush1.bf16.msra.mxu0 0
    %1360 = vmatprep.subr.bf16.mxu0 0
    %1361 = vmatpush1.bf16.msra.mxu0 0
    %1362 = vmatprep.subr.bf16.mxu0 0
    %1363 = vmatpush1.bf16.msra.mxu0 0
    %1364 = vmatprep.subr.bf16.mxu0 0
    %1365 = vmatpush1.bf16.msra.mxu0 0
    %1366 = vmatprep.subr.bf16.mxu0 0
    %1367 = vmatpush1.bf16.msra.mxu0 0
    %1368 = vmatprep.subr.bf16.mxu0 0
    %1369 = vmatpush1.bf16.msra.mxu0 0
    %1370 = vmatprep.subr.bf16.mxu0 0
    %1371 = vmatpush1.bf16.msra.mxu0 0
    %1372 = vmatprep.subr.bf16.mxu0 0
    %1373 = vmatpush1.bf16.msra.mxu0 0
    %1374 = vmatprep.subr.bf16.mxu0 0
    %1375 = vmatpush1.bf16.msra.mxu0 0
    %1376 = vmatprep.subr.bf16.mxu0 0
    %1377 = vmatpush1.bf16.msra.mxu0 0
    %1378 = vmatprep.subr.bf16.mxu0 0
    %1379 = vmatpush1.bf16.msra.mxu0 0
    %1380 = vmatprep.subr.bf16.mxu0 0
    %1381 = vmatpush1.bf16.msra.mxu0 0
    %1382 = vmatprep.subr.bf16.mxu0 0
    %1383 = vmatpush1.bf16.msra.mxu0 0
    %1384 = vmatprep.subr.bf16.mxu0 0
    %1385 = vmatpush1.bf16.msra.mxu0 0
    %1386 = vmatprep.mubr.bf16.mxu0 0
    %1387 = vmatmul.mubr.bf16.gmra.mrb[0].mxu0 %v1252
    %v1388 = vpop.f32.mrb[0].mxu0
    %v1389 = vadd.f32 0.0, %v1388
    %v1390 = vpop.f32.mrb[0].mxu0
    %v1391 = vadd.f32 0.0, %v1390
    %v1392 = vpop.f32.mrb[0].mxu0
    %v1393 = vpop.f32.mrb[0].mxu0
    %1394 = vdwg.mxu0
    %v1395 = vadd.f32 %v1224, %v1307
    %v1396 = vadd.f32 %v1225, %v1309
    %v1397 = vadd.f32 %v1226, %v1348
    %v1398 = vadd.f32 %v1227, %v1350
    %v1399 = vadd.f32 %v1228, %v1389
    %v1400 = vadd.f32 %v1229, %v1391
    %1401 = vrot.lane.b32.xlu0 %v38, 90
    %v1402 = vpop.permute.xlu0 %1401
    %1403 = vrot.lane.b32.xlu0 %v46, 90
    %v1404 = vpop.permute.xlu0 %1403
    %1405 = vrot.lane.b32.xlu0 %v45, 90
    %v1406 = vpop.permute.xlu0 %1405
    %1407 = vrot.lane.b32.xlu0 %v47, 90
    %v1408 = vpop.permute.xlu0 %1407
    %1409 = vrot.lane.b32.xlu0 %v55, 90
    %v1410 = vpop.permute.xlu0 %1409
    %1411 = vrot.lane.b32.xlu0 %v63, 90
    %v1412 = vpop.permute.xlu0 %1411
    %1413 = vrot.lane.b32.xlu0 %v62, 90
    %v1414 = vpop.permute.xlu0 %1413
    %vm1415 = vcmask 736256
    %v1416 = vsel %vm1415, %v1402, %v1404
    %v1417 = vsel %vm1415, %v1404, %v1406
    %v1418 = vsel %vm1415, %v1406, %v1408
    %v1419 = vsel %vm1415, %v1408, %v1410
    %v1420 = vsel %vm1415, %v1410, %v1412
    %v1421 = vsel %vm1415, %v1412, %v1414
    %v1423 = vsel %vm85, %v26, 0
    %v1426 = vsel %vm89, %v1416, 0
    %v1429 = vsel %vm89, %v1417, 0
    %v1432 = vsel %vm89, %v1418, 0
    %v1435 = vsel %vm89, %v1419, 0
    %v1438 = vsel %vm89, %v1420, 0
    %v1441 = vsel %vm89, %v1421, 0
    %1443 = vmatprep.subr.bf16.mxu0 %v1429
    %1444 = vmatpush1.bf16.msra.mxu0 %v1426
    %1445 = vmatprep.subr.bf16.mxu0 0
    %1446 = vmatpush1.bf16.msra.mxu0 0
    %1447 = vmatprep.subr.bf16.mxu0 0
    %1448 = vmatpush1.bf16.msra.mxu0 0
    %1449 = vmatprep.subr.bf16.mxu0 0
    %1450 = vmatpush1.bf16.msra.mxu0 0
    %1451 = vmatprep.subr.bf16.mxu0 0
    %1452 = vmatpush1.bf16.msra.mxu0 0
    %1453 = vmatprep.subr.bf16.mxu0 0
    %1454 = vmatpush1.bf16.msra.mxu0 0
    %1455 = vmatprep.subr.bf16.mxu0 0
    %1456 = vmatpush1.bf16.msra.mxu0 0
    %1457 = vmatprep.subr.bf16.mxu0 0
    %1458 = vmatpush1.bf16.msra.mxu0 0
    %1459 = vmatprep.subr.bf16.mxu0 0
    %1460 = vmatpush1.bf16.msra.mxu0 0
    %1461 = vmatprep.subr.bf16.mxu0 0
    %1462 = vmatpush1.bf16.msra.mxu0 0
    %1463 = vmatprep.subr.bf16.mxu0 0
    %1464 = vmatpush1.bf16.msra.mxu0 0
    %1465 = vmatprep.subr.bf16.mxu0 0
    %1466 = vmatpush1.bf16.msra.mxu0 0
    %1467 = vmatprep.subr.bf16.mxu0 0
    %1468 = vmatpush1.bf16.msra.mxu0 0
    %1469 = vmatprep.subr.bf16.mxu0 0
    %1470 = vmatpush1.bf16.msra.mxu0 0
    %1471 = vmatprep.subr.bf16.mxu0 0
    %1472 = vmatpush1.bf16.msra.mxu0 0
    %1473 = vmatprep.subr.bf16.mxu0 0
    %1474 = vmatpush1.bf16.msra.mxu0 0
    %1475 = vmatprep.mubr.bf16.mxu0 0
    %1476 = vmatmul.mubr.bf16.gmra.mrb[0].mxu0 %v1423
    %v1477 = vpop.f32.mrb[0].mxu0
    %v1478 = vadd.f32 0.0, %v1477
    %v1479 = vpop.f32.mrb[0].mxu0
    %v1480 = vadd.f32 0.0, %v1479
    %v1481 = vpop.f32.mrb[0].mxu0
    %v1482 = vpop.f32.mrb[0].mxu0
    %1483 = vdwg.mxu0
    %1484 = vmatprep.subr.bf16.mxu0 %v1435
    %1485 = vmatpush1.bf16.msra.mxu0 %v1432
    %1486 = vmatprep.subr.bf16.mxu0 0
    %1487 = vmatpush1.bf16.msra.mxu0 0
    %1488 = vmatprep.subr.bf16.mxu0 0
    %1489 = vmatpush1.bf16.msra.mxu0 0
    %1490 = vmatprep.subr.bf16.mxu0 0
    %1491 = vmatpush1.bf16.msra.mxu0 0
    %1492 = vmatprep.subr.bf16.mxu0 0
    %1493 = vmatpush1.bf16.msra.mxu0 0
    %1494 = vmatprep.subr.bf16.mxu0 0
    %1495 = vmatpush1.bf16.msra.mxu0 0
    %1496 = vmatprep.subr.bf16.mxu0 0
    %1497 = vmatpush1.bf16.msra.mxu0 0
    %1498 = vmatprep.subr.bf16.mxu0 0
    %1499 = vmatpush1.bf16.msra.mxu0 0
    %1500 = vmatprep.subr.bf16.mxu0 0
    %1501 = vmatpush1.bf16.msra.mxu0 0
    %1502 = vmatprep.subr.bf16.mxu0 0
    %1503 = vmatpush1.bf16.msra.mxu0 0
    %1504 = vmatprep.subr.bf16.mxu0 0
    %1505 = vmatpush1.bf16.msra.mxu0 0
    %1506 = vmatprep.subr.bf16.mxu0 0
    %1507 = vmatpush1.bf16.msra.mxu0 0
    %1508 = vmatprep.subr.bf16.mxu0 0
    %1509 = vmatpush1.bf16.msra.mxu0 0
    %1510 = vmatprep.subr.bf16.mxu0 0
    %1511 = vmatpush1.bf16.msra.mxu0 0
    %1512 = vmatprep.subr.bf16.mxu0 0
    %1513 = vmatpush1.bf16.msra.mxu0 0
    %1514 = vmatprep.subr.bf16.mxu0 0
    %1515 = vmatpush1.bf16.msra.mxu0 0
    %1516 = vmatprep.mubr.bf16.mxu0 0
    %1517 = vmatmul.mubr.bf16.gmra.mrb[0].mxu0 %v1423
    %v1518 = vpop.f32.mrb[0].mxu0
    %v1519 = vadd.f32 0.0, %v1518
    %v1520 = vpop.f32.mrb[0].mxu0
    %v1521 = vadd.f32 0.0, %v1520
    %v1522 = vpop.f32.mrb[0].mxu0
    %v1523 = vpop.f32.mrb[0].mxu0
    %1524 = vdwg.mxu0
    %1525 = vmatprep.subr.bf16.mxu0 %v1441
    %1526 = vmatpush1.bf16.msra.mxu0 %v1438
    %1527 = vmatprep.subr.bf16.mxu0 0
    %1528 = vmatpush1.bf16.msra.mxu0 0
    %1529 = vmatprep.subr.bf16.mxu0 0
    %1530 = vmatpush1.bf16.msra.mxu0 0
    %1531 = vmatprep.subr.bf16.mxu0 0
    %1532 = vmatpush1.bf16.msra.mxu0 0
    %1533 = vmatprep.subr.bf16.mxu0 0
    %1534 = vmatpush1.bf16.msra.mxu0 0
    %1535 = vmatprep.subr.bf16.mxu0 0
    %1536 = vmatpush1.bf16.msra.mxu0 0
    %1537 = vmatprep.subr.bf16.mxu0 0
    %1538 = vmatpush1.bf16.msra.mxu0 0
    %1539 = vmatprep.subr.bf16.mxu0 0
    %1540 = vmatpush1.bf16.msra.mxu0 0
    %1541 = vmatprep.subr.bf16.mxu0 0
    %1542 = vmatpush1.bf16.msra.mxu0 0
    %1543 = vmatprep.subr.bf16.mxu0 0
    %1544 = vmatpush1.bf16.msra.mxu0 0
    %1545 = vmatprep.subr.bf16.mxu0 0
    %1546 = vmatpush1.bf16.msra.mxu0 0
    %1547 = vmatprep.subr.bf16.mxu0 0
    %1548 = vmatpush1.bf16.msra.mxu0 0
    %1549 = vmatprep.subr.bf16.mxu0 0
    %1550 = vmatpush1.bf16.msra.mxu0 0
    %1551 = vmatprep.subr.bf16.mxu0 0
    %1552 = vmatpush1.bf16.msra.mxu0 0
    %1553 = vmatprep.subr.bf16.mxu0 0
    %1554 = vmatpush1.bf16.msra.mxu0 0
    %1555 = vmatprep.subr.bf16.mxu0 0
    %1556 = vmatpush1.bf16.msra.mxu0 0
    %1557 = vmatprep.mubr.bf16.mxu0 0
    %1558 = vmatmul.mubr.bf16.gmra.mrb[0].mxu0 %v1423
    %v1559 = vpop.f32.mrb[0].mxu0
    %v1560 = vadd.f32 0.0, %v1559
    %v1561 = vpop.f32.mrb[0].mxu0
    %v1562 = vadd.f32 0.0, %v1561
    %v1563 = vpop.f32.mrb[0].mxu0
    %v1564 = vpop.f32.mrb[0].mxu0
    %1565 = vdwg.mxu0
    %v1566 = vadd.f32 %v1395, %v1478
    %v1567 = vadd.f32 %v1396, %v1480
    %v1568 = vadd.f32 %v1397, %v1519
    %v1569 = vadd.f32 %v1398, %v1521
    %v1570 = vadd.f32 %v1399, %v1560
    %v1571 = vadd.f32 %v1400, %v1562
    %v1574 = vcombine.high %v27, %v27
    %v1576 = vunpack.c.l.s4 1983009808
    %v1577 = vunpack.c.0.s8 %v1576
    %v1578 = vlaneseq
    %v1579 = vshrl.u32 %v1578, 7
    %v1580 = vsub.s32 %v1577, %v1579
    %v1581 = vrot.slane %v27, %v1580
    %v1583 = vunpack.c.l.s4 1983009808
    %v1584 = vunpack.c.0.s8 %v1583
    %v1585 = vlaneseq
    %v1586 = vshrl.u32 %v1585, 7
    %v1587 = vsub.s32 %v1584, %v1586
    %v1588 = vrot.slane %v1574, %v1587
    %v1589 = vcombine.high %v1581, %v1581
    %v1590 = vcombine.high %v1588, %v1588
    %v1592 = vunpack.c.l.s4 1983009808
    %v1593 = vunpack.c.0.s8 %v1592
    %v1594 = vlaneseq
    %v1595 = vshrl.u32 %v1594, 7
    %v1596 = vsub.s32 %v1593, %v1595
    %v1597 = vrot.slane %v28, %v1596
    %v1598 = vcombine.high %v1597, %v1597
    %1605 = vmatprep.subr.mxu0 %v1589
    %1606 = vmatpush1.xpose.msra.mxu0 %v1581
    %1607 = vmatprep.subr.mxu0 0.0
    %1608 = vmatpush1.xpose.msra.mxu0 0.0
    %1609 = vmatprep.subr.mxu0 0.0
    %1610 = vmatpush1.xpose.msra.mxu0 0.0
    %1611 = vmatprep.subr.mxu0 0.0
    %1612 = vmatpush1.xpose.msra.mxu0 0.0
    %1613 = vmatprep.subr.mxu0 0.0
    %1614 = vmatpush1.xpose.msra.mxu0 0.0
    %1615 = vmatprep.subr.mxu0 0.0
    %1616 = vmatpush1.xpose.msra.mxu0 0.0
    %1617 = vmatprep.subr.mxu0 0.0
    %1618 = vmatpush1.xpose.msra.mxu0 0.0
    %1619 = vmatprep.subr.mxu0 0.0
    %1620 = vmatpush1.xpose.msra.mxu0 0.0
    %1621 = vmatprep.subr.mxu0 0.0
    %1622 = vmatpush1.xpose.msra.mxu0 0.0
    %1623 = vmatprep.subr.mxu0 0.0
    %1624 = vmatpush1.xpose.msra.mxu0 0.0
    %1625 = vmatprep.subr.mxu0 0.0
    %1626 = vmatpush1.xpose.msra.mxu0 0.0
    %1627 = vmatprep.subr.mxu0 0.0
    %1628 = vmatpush1.xpose.msra.mxu0 0.0
    %1629 = vmatprep.subr.mxu0 0.0
    %1630 = vmatpush1.xpose.msra.mxu0 0.0
    %1631 = vmatprep.subr.mxu0 0.0
    %1632 = vmatpush1.xpose.msra.mxu0 0.0
    %1633 = vmatprep.subr.mxu0 0.0
    %1634 = vmatpush1.xpose.msra.mxu0 0.0
    %1635 = vmatprep.subr.mxu0 0.0
    %1636 = vmatpush1.xpose.msra.mxu0 0.0
    %1637 = vmatprep.subr.mxu0 0.0
    %1638 = vmatpush1.xpose.msra.mxu0 0.0
    %1639 = vmatprep.subr.mxu0 0.0
    %1640 = vmatpush1.xpose.msra.mxu0 0.0
    %1641 = vmatprep.subr.mxu0 0.0
    %1642 = vmatpush1.xpose.msra.mxu0 0.0
    %1643 = vmatprep.subr.mxu0 0.0
    %1644 = vmatpush1.xpose.msra.mxu0 0.0
    %1645 = vmatprep.subr.mxu0 0.0
    %1646 = vmatpush1.xpose.msra.mxu0 0.0
    %1647 = vmatprep.subr.mxu0 0.0
    %1648 = vmatpush1.xpose.msra.mxu0 0.0
    %1649 = vmatprep.subr.mxu0 0.0
    %1650 = vmatpush1.xpose.msra.mxu0 0.0
    %1651 = vmatprep.subr.mxu0 0.0
    %1652 = vmatpush1.xpose.msra.mxu0 0.0
    %1653 = vmatprep.subr.mxu0 0.0
    %1654 = vmatpush1.xpose.msra.mxu0 0.0
    %1655 = vmatprep.subr.mxu0 0.0
    %1656 = vmatpush1.xpose.msra.mxu0 0.0
    %1657 = vmatprep.subr.mxu0 0.0
    %1658 = vmatpush1.xpose.msra.mxu0 0.0
    %1659 = vmatprep.subr.mxu0 0.0
    %1660 = vmatpush1.xpose.msra.mxu0 0.0
    %1661 = vmatprep.subr.mxu0 0.0
    %1662 = vmatpush1.xpose.msra.mxu0 0.0
    %1663 = vmatprep.subr.mxu0 0.0
    %1664 = vmatpush1.xpose.msra.mxu0 0.0
    %1665 = vmatprep.subr.mxu0 0.0
    %1666 = vmatpush1.xpose.msra.mxu0 0.0
    %1667 = vmatprep.subr.mxu0 0.0
    %1668 = vmatpush1.xpose.msra.mxu0 0.0
    %1669 = vmatprep.mubr.f32.mxu0 %v1567
    %1670 = vmatmul.mubr.f32.gmra.mrb[0].mxu0 %v1566
    %v1671 = vpop.f32.mrb[0].mxu0
    %v1672 = vadd.f32 0.0, %v1671
    %v1673 = vpop.f32.mrb[0].mxu0
    %1674 = vdwg.mxu0
    %1675 = vmatprep.subr.mxu0 %v1590
    %1676 = vmatpush1.xpose.msra.mxu0 %v1588
    %1677 = vmatprep.subr.mxu0 0.0
    %1678 = vmatpush1.xpose.msra.mxu0 0.0
    %1679 = vmatprep.subr.mxu0 0.0
    %1680 = vmatpush1.xpose.msra.mxu0 0.0
    %1681 = vmatprep.subr.mxu0 0.0
    %1682 = vmatpush1.xpose.msra.mxu0 0.0
    %1683 = vmatprep.subr.mxu0 0.0
    %1684 = vmatpush1.xpose.msra.mxu0 0.0
    %1685 = vmatprep.subr.mxu0 0.0
    %1686 = vmatpush1.xpose.msra.mxu0 0.0
    %1687 = vmatprep.subr.mxu0 0.0
    %1688 = vmatpush1.xpose.msra.mxu0 0.0
    %1689 = vmatprep.subr.mxu0 0.0
    %1690 = vmatpush1.xpose.msra.mxu0 0.0
    %1691 = vmatprep.subr.mxu0 0.0
    %1692 = vmatpush1.xpose.msra.mxu0 0.0
    %1693 = vmatprep.subr.mxu0 0.0
    %1694 = vmatpush1.xpose.msra.mxu0 0.0
    %1695 = vmatprep.subr.mxu0 0.0
    %1696 = vmatpush1.xpose.msra.mxu0 0.0
    %1697 = vmatprep.subr.mxu0 0.0
    %1698 = vmatpush1.xpose.msra.mxu0 0.0
    %1699 = vmatprep.subr.mxu0 0.0
    %1700 = vmatpush1.xpose.msra.mxu0 0.0
    %1701 = vmatprep.subr.mxu0 0.0
    %1702 = vmatpush1.xpose.msra.mxu0 0.0
    %1703 = vmatprep.subr.mxu0 0.0
    %1704 = vmatpush1.xpose.msra.mxu0 0.0
    %1705 = vmatprep.subr.mxu0 0.0
    %1706 = vmatpush1.xpose.msra.mxu0 0.0
    %1707 = vmatprep.subr.mxu0 0.0
    %1708 = vmatpush1.xpose.msra.mxu0 0.0
    %1709 = vmatprep.subr.mxu0 0.0
    %1710 = vmatpush1.xpose.msra.mxu0 0.0
    %1711 = vmatprep.subr.mxu0 0.0
    %1712 = vmatpush1.xpose.msra.mxu0 0.0
    %1713 = vmatprep.subr.mxu0 0.0
    %1714 = vmatpush1.xpose.msra.mxu0 0.0
    %1715 = vmatprep.subr.mxu0 0.0
    %1716 = vmatpush1.xpose.msra.mxu0 0.0
    %1717 = vmatprep.subr.mxu0 0.0
    %1718 = vmatpush1.xpose.msra.mxu0 0.0
    %1719 = vmatprep.subr.mxu0 0.0
    %1720 = vmatpush1.xpose.msra.mxu0 0.0
    %1721 = vmatprep.subr.mxu0 0.0
    %1722 = vmatpush1.xpose.msra.mxu0 0.0
    %1723 = vmatprep.subr.mxu0 0.0
    %1724 = vmatpush1.xpose.msra.mxu0 0.0
    %1725 = vmatprep.subr.mxu0 0.0
    %1726 = vmatpush1.xpose.msra.mxu0 0.0
    %1727 = vmatprep.subr.mxu0 0.0
    %1728 = vmatpush1.xpose.msra.mxu0 0.0
    %1729 = vmatprep.subr.mxu0 0.0
    %1730 = vmatpush1.xpose.msra.mxu0 0.0
    %1731 = vmatprep.subr.mxu0 0.0
    %1732 = vmatpush1.xpose.msra.mxu0 0.0
    %1733 = vmatprep.subr.mxu0 0.0
    %1734 = vmatpush1.xpose.msra.mxu0 0.0
    %1735 = vmatprep.subr.mxu0 0.0
    %1736 = vmatpush1.xpose.msra.mxu0 0.0
    %1737 = vmatprep.subr.mxu0 0.0
    %1738 = vmatpush1.xpose.msra.mxu0 0.0
    %1739 = vmatprep.mubr.f32.mxu0 %v1569
    %1740 = vmatmul.mubr.f32.gmra.mrb[0].mxu0 %v1568
    %v1741 = vpop.f32.mrb[0].mxu0
    %v1742 = vadd.f32 %v1672, %v1741
    %v1743 = vpop.f32.mrb[0].mxu0
    %1744 = vdwg.mxu0
    %1745 = vmatprep.subr.mxu0 %v1598
    %1746 = vmatpush1.xpose.msra.mxu0 %v1597
    %1747 = vmatprep.subr.mxu0 0.0
    %1748 = vmatpush1.xpose.msra.mxu0 0.0
    %1749 = vmatprep.subr.mxu0 0.0
    %1750 = vmatpush1.xpose.msra.mxu0 0.0
    %1751 = vmatprep.subr.mxu0 0.0
    %1752 = vmatpush1.xpose.msra.mxu0 0.0
    %1753 = vmatprep.subr.mxu0 0.0
    %1754 = vmatpush1.xpose.msra.mxu0 0.0
    %1755 = vmatprep.subr.mxu0 0.0
    %1756 = vmatpush1.xpose.msra.mxu0 0.0
    %1757 = vmatprep.subr.mxu0 0.0
    %1758 = vmatpush1.xpose.msra.mxu0 0.0
    %1759 = vmatprep.subr.mxu0 0.0
    %1760 = vmatpush1.xpose.msra.mxu0 0.0
    %1761 = vmatprep.subr.mxu0 0.0
    %1762 = vmatpush1.xpose.msra.mxu0 0.0
    %1763 = vmatprep.subr.mxu0 0.0
    %1764 = vmatpush1.xpose.msra.mxu0 0.0
    %1765 = vmatprep.subr.mxu0 0.0
    %1766 = vmatpush1.xpose.msra.mxu0 0.0
    %1767 = vmatprep.subr.mxu0 0.0
    %1768 = vmatpush1.xpose.msra.mxu0 0.0
    %1769 = vmatprep.subr.mxu0 0.0
    %1770 = vmatpush1.xpose.msra.mxu0 0.0
    %1771 = vmatprep.subr.mxu0 0.0
    %1772 = vmatpush1.xpose.msra.mxu0 0.0
    %1773 = vmatprep.subr.mxu0 0.0
    %1774 = vmatpush1.xpose.msra.mxu0 0.0
    %1775 = vmatprep.subr.mxu0 0.0
    %1776 = vmatpush1.xpose.msra.mxu0 0.0
    %1777 = vmatprep.subr.mxu0 0.0
    %1778 = vmatpush1.xpose.msra.mxu0 0.0
    %1779 = vmatprep.subr.mxu0 0.0
    %1780 = vmatpush1.xpose.msra.mxu0 0.0
    %1781 = vmatprep.subr.mxu0 0.0
    %1782 = vmatpush1.xpose.msra.mxu0 0.0
    %1783 = vmatprep.subr.mxu0 0.0
    %1784 = vmatpush1.xpose.msra.mxu0 0.0
    %1785 = vmatprep.subr.mxu0 0.0
    %1786 = vmatpush1.xpose.msra.mxu0 0.0
    %1787 = vmatprep.subr.mxu0 0.0
    %1788 = vmatpush1.xpose.msra.mxu0 0.0
    %1789 = vmatprep.subr.mxu0 0.0
    %1790 = vmatpush1.xpose.msra.mxu0 0.0
    %1791 = vmatprep.subr.mxu0 0.0
    %1792 = vmatpush1.xpose.msra.mxu0 0.0
    %1793 = vmatprep.subr.mxu0 0.0
    %1794 = vmatpush1.xpose.msra.mxu0 0.0
    %1795 = vmatprep.subr.mxu0 0.0
    %1796 = vmatpush1.xpose.msra.mxu0 0.0
    %1797 = vmatprep.subr.mxu0 0.0
    %1798 = vmatpush1.xpose.msra.mxu0 0.0
    %1799 = vmatprep.subr.mxu0 0.0
    %1800 = vmatpush1.xpose.msra.mxu0 0.0
    %1801 = vmatprep.subr.mxu0 0.0
    %1802 = vmatpush1.xpose.msra.mxu0 0.0
    %1803 = vmatprep.subr.mxu0 0.0
    %1804 = vmatpush1.xpose.msra.mxu0 0.0
    %1805 = vmatprep.subr.mxu0 0.0
    %1806 = vmatpush1.xpose.msra.mxu0 0.0
    %1807 = vmatprep.subr.mxu0 0.0
    %1808 = vmatpush1.xpose.msra.mxu0 0.0
    %1809 = vmatprep.mubr.f32.mxu0 %v1571
    %1810 = vmatmul.mubr.f32.gmra.mrb[0].mxu0 %v1570
    %v1811 = vpop.f32.mrb[0].mxu0
    %v1812 = vadd.f32 %v1742, %v1811
    %v1813 = vpop.f32.mrb[0].mxu0
    %1814 = vdwg.mxu0
    %v1815 = vmul.f32 %v1812, 0.00390625
    %vm1816 = vcmask 15360
    %v1818 = vsel %vm1816, %v1815, 0
    %v1820 = vsel %vm89, %v1581, 0
    %v1822 = vsel %vm89, %v1589, 0
    %v1824 = vsel %vm89, %v1588, 0
    %v1826 = vsel %vm89, %v1590, 0
    %v1828 = vsel %vm89, %v1597, 0
    %v1830 = vsel %vm89, %v1598, 0
    %1832 = vmatprep.subr.mxu0 %v1822
    %1833 = vmatpush1.msra.mxu0 %v1820
    %1834 = vmatprep.subr.mxu0 0.0
    %1835 = vmatpush1.msra.mxu0 0.0
    %1836 = vmatprep.subr.mxu0 0.0
    %1837 = vmatpush1.msra.mxu0 0.0
    %1838 = vmatprep.subr.mxu0 0.0
    %1839 = vmatpush1.msra.mxu0 0.0
    %1840 = vmatprep.subr.mxu0 0.0
    %1841 = vmatpush1.msra.mxu0 0.0
    %1842 = vmatprep.subr.mxu0 0.0
    %1843 = vmatpush1.msra.mxu0 0.0
    %1844 = vmatprep.subr.mxu0 0.0
    %1845 = vmatpush1.msra.mxu0 0.0
    %1846 = vmatprep.subr.mxu0 0.0
    %1847 = vmatpush1.msra.mxu0 0.0
    %1848 = vmatprep.subr.mxu0 0.0
    %1849 = vmatpush1.msra.mxu0 0.0
    %1850 = vmatprep.subr.mxu0 0.0
    %1851 = vmatpush1.msra.mxu0 0.0
    %1852 = vmatprep.subr.mxu0 0.0
    %1853 = vmatpush1.msra.mxu0 0.0
    %1854 = vmatprep.subr.mxu0 0.0
    %1855 = vmatpush1.msra.mxu0 0.0
    %1856 = vmatprep.subr.mxu0 0.0
    %1857 = vmatpush1.msra.mxu0 0.0
    %1858 = vmatprep.subr.mxu0 0.0
    %1859 = vmatpush1.msra.mxu0 0.0
    %1860 = vmatprep.subr.mxu0 0.0
    %1861 = vmatpush1.msra.mxu0 0.0
    %1862 = vmatprep.subr.mxu0 0.0
    %1863 = vmatpush1.msra.mxu0 0.0
    %1864 = vmatprep.subr.mxu0 0.0
    %1865 = vmatpush1.msra.mxu0 0.0
    %1866 = vmatprep.subr.mxu0 0.0
    %1867 = vmatpush1.msra.mxu0 0.0
    %1868 = vmatprep.subr.mxu0 0.0
    %1869 = vmatpush1.msra.mxu0 0.0
    %1870 = vmatprep.subr.mxu0 0.0
    %1871 = vmatpush1.msra.mxu0 0.0
    %1872 = vmatprep.subr.mxu0 0.0
    %1873 = vmatpush1.msra.mxu0 0.0
    %1874 = vmatprep.subr.mxu0 0.0
    %1875 = vmatpush1.msra.mxu0 0.0
    %1876 = vmatprep.subr.mxu0 0.0
    %1877 = vmatpush1.msra.mxu0 0.0
    %1878 = vmatprep.subr.mxu0 0.0
    %1879 = vmatpush1.msra.mxu0 0.0
    %1880 = vmatprep.subr.mxu0 0.0
    %1881 = vmatpush1.msra.mxu0 0.0
    %1882 = vmatprep.subr.mxu0 0.0
    %1883 = vmatpush1.msra.mxu0 0.0
    %1884 = vmatprep.subr.mxu0 0.0
    %1885 = vmatpush1.msra.mxu0 0.0
    %1886 = vmatprep.subr.mxu0 0.0
    %1887 = vmatpush1.msra.mxu0 0.0
    %1888 = vmatprep.subr.mxu0 0.0
    %1889 = vmatpush1.msra.mxu0 0.0
    %1890 = vmatprep.subr.mxu0 0.0
    %1891 = vmatpush1.msra.mxu0 0.0
    %1892 = vmatprep.subr.mxu0 0.0
    %1893 = vmatpush1.msra.mxu0 0.0
    %1894 = vmatprep.subr.mxu0 0.0
    %1895 = vmatpush1.msra.mxu0 0.0
    %1896 = vmatprep.mubr.f32.mxu0 0.0
    %1897 = vmatmul.mubr.f32.gmra.mrb[0].mxu0 %v1818
    %v1898 = vpop.f32.mrb[0].mxu0
    %v1899 = vadd.f32 0.0, %v1898
    %v1900 = vpop.f32.mrb[0].mxu0
    %v1901 = vadd.f32 0.0, %v1900
    %1902 = vdwg.mxu0
    %1903 = vmatprep.subr.mxu0 %v1826
    %1904 = vmatpush1.msra.mxu0 %v1824
    %1905 = vmatprep.subr.mxu0 0.0
    %1906 = vmatpush1.msra.mxu0 0.0
    %1907 = vmatprep.subr.mxu0 0.0
    %1908 = vmatpush1.msra.mxu0 0.0
    %1909 = vmatprep.subr.mxu0 0.0
    %1910 = vmatpush1.msra.mxu0 0.0
    %1911 = vmatprep.subr.mxu0 0.0
    %1912 = vmatpush1.msra.mxu0 0.0
    %1913 = vmatprep.subr.mxu0 0.0
    %1914 = vmatpush1.msra.mxu0 0.0
    %1915 = vmatprep.subr.mxu0 0.0
    %1916 = vmatpush1.msra.mxu0 0.0
    %1917 = vmatprep.subr.mxu0 0.0
    %1918 = vmatpush1.msra.mxu0 0.0
    %1919 = vmatprep.subr.mxu0 0.0
    %1920 = vmatpush1.msra.mxu0 0.0
    %1921 = vmatprep.subr.mxu0 0.0
    %1922 = vmatpush1.msra.mxu0 0.0
    %1923 = vmatprep.subr.mxu0 0.0
    %1924 = vmatpush1.msra.mxu0 0.0
    %1925 = vmatprep.subr.mxu0 0.0
    %1926 = vmatpush1.msra.mxu0 0.0
    %1927 = vmatprep.subr.mxu0 0.0
    %1928 = vmatpush1.msra.mxu0 0.0
    %1929 = vmatprep.subr.mxu0 0.0
    %1930 = vmatpush1.msra.mxu0 0.0
    %1931 = vmatprep.subr.mxu0 0.0
    %1932 = vmatpush1.msra.mxu0 0.0
    %1933 = vmatprep.subr.mxu0 0.0
    %1934 = vmatpush1.msra.mxu0 0.0
    %1935 = vmatprep.subr.mxu0 0.0
    %1936 = vmatpush1.msra.mxu0 0.0
    %1937 = vmatprep.subr.mxu0 0.0
    %1938 = vmatpush1.msra.mxu0 0.0
    %1939 = vmatprep.subr.mxu0 0.0
    %1940 = vmatpush1.msra.mxu0 0.0
    %1941 = vmatprep.subr.mxu0 0.0
    %1942 = vmatpush1.msra.mxu0 0.0
    %1943 = vmatprep.subr.mxu0 0.0
    %1944 = vmatpush1.msra.mxu0 0.0
    %1945 = vmatprep.subr.mxu0 0.0
    %1946 = vmatpush1.msra.mxu0 0.0
    %1947 = vmatprep.subr.mxu0 0.0
    %1948 = vmatpush1.msra.mxu0 0.0
    %1949 = vmatprep.subr.mxu0 0.0
    %1950 = vmatpush1.msra.mxu0 0.0
    %1951 = vmatprep.subr.mxu0 0.0
    %1952 = vmatpush1.msra.mxu0 0.0
    %1953 = vmatprep.subr.mxu0 0.0
    %1954 = vmatpush1.msra.mxu0 0.0
    %1955 = vmatprep.subr.mxu0 0.0
    %1956 = vmatpush1.msra.mxu0 0.0
    %1957 = vmatprep.subr.mxu0 0.0
    %1958 = vmatpush1.msra.mxu0 0.0
    %1959 = vmatprep.subr.mxu0 0.0
    %1960 = vmatpush1.msra.mxu0 0.0
    %1961 = vmatprep.subr.mxu0 0.0
    %1962 = vmatpush1.msra.mxu0 0.0
    %1963 = vmatprep.subr.mxu0 0.0
    %1964 = vmatpush1.msra.mxu0 0.0
    %1965 = vmatprep.subr.mxu0 0.0
    %1966 = vmatpush1.msra.mxu0 0.0
    %1967 = vmatprep.mubr.f32.mxu0 0.0
    %1968 = vmatmul.mubr.f32.gmra.mrb[0].mxu0 %v1818
    %v1969 = vpop.f32.mrb[0].mxu0
    %v1970 = vadd.f32 0.0, %v1969
    %v1971 = vpop.f32.mrb[0].mxu0
    %v1972 = vadd.f32 0.0, %v1971
    %1973 = vdwg.mxu0
    %1974 = vmatprep.subr.mxu0 %v1830
    %1975 = vmatpush1.msra.mxu0 %v1828
    %1976 = vmatprep.subr.mxu0 0.0
    %1977 = vmatpush1.msra.mxu0 0.0
    %1978 = vmatprep.subr.mxu0 0.0
    %1979 = vmatpush1.msra.mxu0 0.0
    %1980 = vmatprep.subr.mxu0 0.0
    %1981 = vmatpush1.msra.mxu0 0.0
    %1982 = vmatprep.subr.mxu0 0.0
    %1983 = vmatpush1.msra.mxu0 0.0
    %1984 = vmatprep.subr.mxu0 0.0
    %1985 = vmatpush1.msra.mxu0 0.0
    %1986 = vmatprep.subr.mxu0 0.0
    %1987 = vmatpush1.msra.mxu0 0.0
    %1988 = vmatprep.subr.mxu0 0.0
    %1989 = vmatpush1.msra.mxu0 0.0
    %1990 = vmatprep.subr.mxu0 0.0
    %1991 = vmatpush1.msra.mxu0 0.0
    %1992 = vmatprep.subr.mxu0 0.0
    %1993 = vmatpush1.msra.mxu0 0.0
    %1994 = vmatprep.subr.mxu0 0.0
    %1995 = vmatpush1.msra.mxu0 0.0
    %1996 = vmatprep.subr.mxu0 0.0
    %1997 = vmatpush1.msra.mxu0 0.0
    %1998 = vmatprep.subr.mxu0 0.0
    %1999 = vmatpush1.msra.mxu0 0.0
    %2000 = vmatprep.subr.mxu0 0.0
    %2001 = vmatpush1.msra.mxu0 0.0
    %2002 = vmatprep.subr.mxu0 0.0
    %2003 = vmatpush1.msra.mxu0 0.0
    %2004 = vmatprep.subr.mxu0 0.0
    %2005 = vmatpush1.msra.mxu0 0.0
    %2006 = vmatprep.subr.mxu0 0.0
    %2007 = vmatpush1.msra.mxu0 0.0
    %2008 = vmatprep.subr.mxu0 0.0
    %2009 = vmatpush1.msra.mxu0 0.0
    %2010 = vmatprep.subr.mxu0 0.0
    %2011 = vmatpush1.msra.mxu0 0.0
    %2012 = vmatprep.subr.mxu0 0.0
    %2013 = vmatpush1.msra.mxu0 0.0
    %2014 = vmatprep.subr.mxu0 0.0
    %2015 = vmatpush1.msra.mxu0 0.0
    %2016 = vmatprep.subr.mxu0 0.0
    %2017 = vmatpush1.msra.mxu0 0.0
    %2018 = vmatprep.subr.mxu0 0.0
    %2019 = vmatpush1.msra.mxu0 0.0
    %2020 = vmatprep.subr.mxu0 0.0
    %2021 = vmatpush1.msra.mxu0 0.0
    %2022 = vmatprep.subr.mxu0 0.0
    %2023 = vmatpush1.msra.mxu0 0.0
    %2024 = vmatprep.subr.mxu0 0.0
    %2025 = vmatpush1.msra.mxu0 0.0
    %2026 = vmatprep.subr.mxu0 0.0
    %2027 = vmatpush1.msra.mxu0 0.0
    %2028 = vmatprep.subr.mxu0 0.0
    %2029 = vmatpush1.msra.mxu0 0.0
    %2030 = vmatprep.subr.mxu0 0.0
    %2031 = vmatpush1.msra.mxu0 0.0
    %2032 = vmatprep.subr.mxu0 0.0
    %2033 = vmatpush1.msra.mxu0 0.0
    %2034 = vmatprep.subr.mxu0 0.0
    %2035 = vmatpush1.msra.mxu0 0.0
    %2036 = vmatprep.subr.mxu0 0.0
    %2037 = vmatpush1.msra.mxu0 0.0
    %2038 = vmatprep.mubr.f32.mxu0 0.0
    %2039 = vmatmul.mubr.f32.gmra.mrb[0].mxu0 %v1818
    %v2040 = vpop.f32.mrb[0].mxu0
    %v2041 = vadd.f32 0.0, %v2040
    %v2042 = vpop.f32.mrb[0].mxu0
    %v2043 = vadd.f32 0.0, %v2042
    %2044 = vdwg.mxu0
    %v2045 = vsub.f32 %v1566, %v1899
    %v2046 = vsub.f32 %v1567, %v1901
    %v2047 = vsub.f32 %v1568, %v1970
    %v2048 = vsub.f32 %v1569, %v1972
    %v2049 = vsub.f32 %v1570, %v2041
    %v2050 = vsub.f32 %v1571, %v2043
    %v2051 = vmul.f32 %v2045, %v2045
    %v2052 = vmul.f32 %v2046, %v2046
    %v2053 = vmul.f32 %v2047, %v2047
    %v2054 = vmul.f32 %v2048, %v2048
    %v2055 = vmul.f32 %v2049, %v2049
    %v2056 = vmul.f32 %v2050, %v2050
    %2057 = vmatprep.subr.mxu0 %v1589
    %2058 = vmatpush1.xpose.msra.mxu0 %v1581
    %2059 = vmatprep.subr.mxu0 0.0
    %2060 = vmatpush1.xpose.msra.mxu0 0.0
    %2061 = vmatprep.subr.mxu0 0.0
    %2062 = vmatpush1.xpose.msra.mxu0 0.0
    %2063 = vmatprep.subr.mxu0 0.0
    %2064 = vmatpush1.xpose.msra.mxu0 0.0
    %2065 = vmatprep.subr.mxu0 0.0
    %2066 = vmatpush1.xpose.msra.mxu0 0.0
    %2067 = vmatprep.subr.mxu0 0.0
    %2068 = vmatpush1.xpose.msra.mxu0 0.0
    %2069 = vmatprep.subr.mxu0 0.0
    %2070 = vmatpush1.xpose.msra.mxu0 0.0
    %2071 = vmatprep.subr.mxu0 0.0
    %2072 = vmatpush1.xpose.msra.mxu0 0.0
    %2073 = vmatprep.subr.mxu0 0.0
    %2074 = vmatpush1.xpose.msra.mxu0 0.0
    %2075 = vmatprep.subr.mxu0 0.0
    %2076 = vmatpush1.xpose.msra.mxu0 0.0
    %2077 = vmatprep.subr.mxu0 0.0
    %2078 = vmatpush1.xpose.msra.mxu0 0.0
    %2079 = vmatprep.subr.mxu0 0.0
    %2080 = vmatpush1.xpose.msra.mxu0 0.0
    %2081 = vmatprep.subr.mxu0 0.0
    %2082 = vmatpush1.xpose.msra.mxu0 0.0
    %2083 = vmatprep.subr.mxu0 0.0
    %2084 = vmatpush1.xpose.msra.mxu0 0.0
    %2085 = vmatprep.subr.mxu0 0.0
    %2086 = vmatpush1.xpose.msra.mxu0 0.0
    %2087 = vmatprep.subr.mxu0 0.0
    %2088 = vmatpush1.xpose.msra.mxu0 0.0
    %2089 = vmatprep.subr.mxu0 0.0
    %2090 = vmatpush1.xpose.msra.mxu0 0.0
    %2091 = vmatprep.subr.mxu0 0.0
    %2092 = vmatpush1.xpose.msra.mxu0 0.0
    %2093 = vmatprep.subr.mxu0 0.0
    %2094 = vmatpush1.xpose.msra.mxu0 0.0
    %2095 = vmatprep.subr.mxu0 0.0
    %2096 = vmatpush1.xpose.msra.mxu0 0.0
    %2097 = vmatprep.subr.mxu0 0.0
    %2098 = vmatpush1.xpose.msra.mxu0 0.0
    %2099 = vmatprep.subr.mxu0 0.0
    %2100 = vmatpush1.xpose.msra.mxu0 0.0
    %2101 = vmatprep.subr.mxu0 0.0
    %2102 = vmatpush1.xpose.msra.mxu0 0.0
    %2103 = vmatprep.subr.mxu0 0.0
    %2104 = vmatpush1.xpose.msra.mxu0 0.0
    %2105 = vmatprep.subr.mxu0 0.0
    %2106 = vmatpush1.xpose.msra.mxu0 0.0
    %2107 = vmatprep.subr.mxu0 0.0
    %2108 = vmatpush1.xpose.msra.mxu0 0.0
    %2109 = vmatprep.subr.mxu0 0.0
    %2110 = vmatpush1.xpose.msra.mxu0 0.0
    %2111 = vmatprep.subr.mxu0 0.0
    %2112 = vmatpush1.xpose.msra.mxu0 0.0
    %2113 = vmatprep.subr.mxu0 0.0
    %2114 = vmatpush1.xpose.msra.mxu0 0.0
    %2115 = vmatprep.subr.mxu0 0.0
    %2116 = vmatpush1.xpose.msra.mxu0 0.0
    %2117 = vmatprep.subr.mxu0 0.0
    %2118 = vmatpush1.xpose.msra.mxu0 0.0
    %2119 = vmatprep.subr.mxu0 0.0
    %2120 = vmatpush1.xpose.msra.mxu0 0.0
    %2121 = vmatprep.mubr.f32.mxu0 %v2052
    %2122 = vmatmul.mubr.f32.gmra.mrb[0].mxu0 %v2051
    %v2123 = vpop.f32.mrb[0].mxu0
    %v2124 = vadd.f32 0.0, %v2123
    %v2125 = vpop.f32.mrb[0].mxu0
    %2126 = vdwg.mxu0
    %2127 = vmatprep.subr.mxu0 %v1590
    %2128 = vmatpush1.xpose.msra.mxu0 %v1588
    %2129 = vmatprep.subr.mxu0 0.0
    %2130 = vmatpush1.xpose.msra.mxu0 0.0
    %2131 = vmatprep.subr.mxu0 0.0
    %2132 = vmatpush1.xpose.msra.mxu0 0.0
    %2133 = vmatprep.subr.mxu0 0.0
    %2134 = vmatpush1.xpose.msra.mxu0 0.0
    %2135 = vmatprep.subr.mxu0 0.0
    %2136 = vmatpush1.xpose.msra.mxu0 0.0
    %2137 = vmatprep.subr.mxu0 0.0
    %2138 = vmatpush1.xpose.msra.mxu0 0.0
    %2139 = vmatprep.subr.mxu0 0.0
    %2140 = vmatpush1.xpose.msra.mxu0 0.0
    %2141 = vmatprep.subr.mxu0 0.0
    %2142 = vmatpush1.xpose.msra.mxu0 0.0
    %2143 = vmatprep.subr.mxu0 0.0
    %2144 = vmatpush1.xpose.msra.mxu0 0.0
    %2145 = vmatprep.subr.mxu0 0.0
    %2146 = vmatpush1.xpose.msra.mxu0 0.0
    %2147 = vmatprep.subr.mxu0 0.0
    %2148 = vmatpush1.xpose.msra.mxu0 0.0
    %2149 = vmatprep.subr.mxu0 0.0
    %2150 = vmatpush1.xpose.msra.mxu0 0.0
    %2151 = vmatprep.subr.mxu0 0.0
    %2152 = vmatpush1.xpose.msra.mxu0 0.0
    %2153 = vmatprep.subr.mxu0 0.0
    %2154 = vmatpush1.xpose.msra.mxu0 0.0
    %2155 = vmatprep.subr.mxu0 0.0
    %2156 = vmatpush1.xpose.msra.mxu0 0.0
    %2157 = vmatprep.subr.mxu0 0.0
    %2158 = vmatpush1.xpose.msra.mxu0 0.0
    %2159 = vmatprep.subr.mxu0 0.0
    %2160 = vmatpush1.xpose.msra.mxu0 0.0
    %2161 = vmatprep.subr.mxu0 0.0
    %2162 = vmatpush1.xpose.msra.mxu0 0.0
    %2163 = vmatprep.subr.mxu0 0.0
    %2164 = vmatpush1.xpose.msra.mxu0 0.0
    %2165 = vmatprep.subr.mxu0 0.0
    %2166 = vmatpush1.xpose.msra.mxu0 0.0
    %2167 = vmatprep.subr.mxu0 0.0
    %2168 = vmatpush1.xpose.msra.mxu0 0.0
    %2169 = vmatprep.subr.mxu0 0.0
    %2170 = vmatpush1.xpose.msra.mxu0 0.0
    %2171 = vmatprep.subr.mxu0 0.0
    %2172 = vmatpush1.xpose.msra.mxu0 0.0
    %2173 = vmatprep.subr.mxu0 0.0
    %2174 = vmatpush1.xpose.msra.mxu0 0.0
    %2175 = vmatprep.subr.mxu0 0.0
    %2176 = vmatpush1.xpose.msra.mxu0 0.0
    %2177 = vmatprep.subr.mxu0 0.0
    %2178 = vmatpush1.xpose.msra.mxu0 0.0
    %2179 = vmatprep.subr.mxu0 0.0
    %2180 = vmatpush1.xpose.msra.mxu0 0.0
    %2181 = vmatprep.subr.mxu0 0.0
    %2182 = vmatpush1.xpose.msra.mxu0 0.0
    %2183 = vmatprep.subr.mxu0 0.0
    %2184 = vmatpush1.xpose.msra.mxu0 0.0
    %2185 = vmatprep.subr.mxu0 0.0
    %2186 = vmatpush1.xpose.msra.mxu0 0.0
    %2187 = vmatprep.subr.mxu0 0.0
    %2188 = vmatpush1.xpose.msra.mxu0 0.0
    %2189 = vmatprep.subr.mxu0 0.0
    %2190 = vmatpush1.xpose.msra.mxu0 0.0
    %2191 = vmatprep.mubr.f32.mxu0 %v2054
    %2192 = vmatmul.mubr.f32.gmra.mrb[0].mxu0 %v2053
    %v2193 = vpop.f32.mrb[0].mxu0
    %v2194 = vadd.f32 %v2124, %v2193
    %v2195 = vpop.f32.mrb[0].mxu0
    %2196 = vdwg.mxu0
    %2197 = vmatprep.subr.mxu0 %v1598
    %2198 = vmatpush1.xpose.msra.mxu0 %v1597
    %2199 = vmatprep.subr.mxu0 0.0
    %2200 = vmatpush1.xpose.msra.mxu0 0.0
    %2201 = vmatprep.subr.mxu0 0.0
    %2202 = vmatpush1.xpose.msra.mxu0 0.0
    %2203 = vmatprep.subr.mxu0 0.0
    %2204 = vmatpush1.xpose.msra.mxu0 0.0
    %2205 = vmatprep.subr.mxu0 0.0
    %2206 = vmatpush1.xpose.msra.mxu0 0.0
    %2207 = vmatprep.subr.mxu0 0.0
    %2208 = vmatpush1.xpose.msra.mxu0 0.0
    %2209 = vmatprep.subr.mxu0 0.0
    %2210 = vmatpush1.xpose.msra.mxu0 0.0
    %2211 = vmatprep.subr.mxu0 0.0
    %2212 = vmatpush1.xpose.msra.mxu0 0.0
    %2213 = vmatprep.subr.mxu0 0.0
    %2214 = vmatpush1.xpose.msra.mxu0 0.0
    %2215 = vmatprep.subr.mxu0 0.0
    %2216 = vmatpush1.xpose.msra.mxu0 0.0
    %2217 = vmatprep.subr.mxu0 0.0
    %2218 = vmatpush1.xpose.msra.mxu0 0.0
    %2219 = vmatprep.subr.mxu0 0.0
    %2220 = vmatpush1.xpose.msra.mxu0 0.0
    %2221 = vmatprep.subr.mxu0 0.0
    %2222 = vmatpush1.xpose.msra.mxu0 0.0
    %2223 = vmatprep.subr.mxu0 0.0
    %2224 = vmatpush1.xpose.msra.mxu0 0.0
    %2225 = vmatprep.subr.mxu0 0.0
    %2226 = vmatpush1.xpose.msra.mxu0 0.0
    %2227 = vmatprep.subr.mxu0 0.0
    %2228 = vmatpush1.xpose.msra.mxu0 0.0
    %2229 = vmatprep.subr.mxu0 0.0
    %2230 = vmatpush1.xpose.msra.mxu0 0.0
    %2231 = vmatprep.subr.mxu0 0.0
    %2232 = vmatpush1.xpose.msra.mxu0 0.0
    %2233 = vmatprep.subr.mxu0 0.0
    %2234 = vmatpush1.xpose.msra.mxu0 0.0
    %2235 = vmatprep.subr.mxu0 0.0
    %2236 = vmatpush1.xpose.msra.mxu0 0.0
    %2237 = vmatprep.subr.mxu0 0.0
    %2238 = vmatpush1.xpose.msra.mxu0 0.0
    %2239 = vmatprep.subr.mxu0 0.0
    %2240 = vmatpush1.xpose.msra.mxu0 0.0
    %2241 = vmatprep.subr.mxu0 0.0
    %2242 = vmatpush1.xpose.msra.mxu0 0.0
    %2243 = vmatprep.subr.mxu0 0.0
    %2244 = vmatpush1.xpose.msra.mxu0 0.0
    %2245 = vmatprep.subr.mxu0 0.0
    %2246 = vmatpush1.xpose.msra.mxu0 0.0
    %2247 = vmatprep.subr.mxu0 0.0
    %2248 = vmatpush1.xpose.msra.mxu0 0.0
    %2249 = vmatprep.subr.mxu0 0.0
    %2250 = vmatpush1.xpose.msra.mxu0 0.0
    %2251 = vmatprep.subr.mxu0 0.0
    %2252 = vmatpush1.xpose.msra.mxu0 0.0
    %2253 = vmatprep.subr.mxu0 0.0
    %2254 = vmatpush1.xpose.msra.mxu0 0.0
    %2255 = vmatprep.subr.mxu0 0.0
    %2256 = vmatpush1.xpose.msra.mxu0 0.0
    %2257 = vmatprep.subr.mxu0 0.0
    %2258 = vmatpush1.xpose.msra.mxu0 0.0
    %2259 = vmatprep.subr.mxu0 0.0
    %2260 = vmatpush1.xpose.msra.mxu0 0.0
    %2261 = vmatprep.mubr.f32.mxu0 %v2056
    %2262 = vmatmul.mubr.f32.gmra.mrb[0].mxu0 %v2055
    %v2263 = vpop.f32.mrb[0].mxu0
    %v2264 = vadd.f32 %v2194, %v2263
    %v2265 = vpop.f32.mrb[0].mxu0
    %2266 = vdwg.mxu0
    %v2267 = vmul.f32 %v2264, 0.00390625
    %v2268 = vadd.f32 %v2267, 1e-05
    %v2269 = vrsqrt.pop %v2268
    %v2271 = vsel %vm1816, %v2269, 0
    %2273 = vmatprep.subr.mxu0 %v1822
    %2274 = vmatpush1.msra.mxu0 %v1820
    %2275 = vmatprep.subr.mxu0 0.0
    %2276 = vmatpush1.msra.mxu0 0.0
    %2277 = vmatprep.subr.mxu0 0.0
    %2278 = vmatpush1.msra.mxu0 0.0
    %2279 = vmatprep.subr.mxu0 0.0
    %2280 = vmatpush1.msra.mxu0 0.0
    %2281 = vmatprep.subr.mxu0 0.0
    %2282 = vmatpush1.msra.mxu0 0.0
    %2283 = vmatprep.subr.mxu0 0.0
    %2284 = vmatpush1.msra.mxu0 0.0
    %2285 = vmatprep.subr.mxu0 0.0
    %2286 = vmatpush1.msra.mxu0 0.0
    %2287 = vmatprep.subr.mxu0 0.0
    %2288 = vmatpush1.msra.mxu0 0.0
    %2289 = vmatprep.subr.mxu0 0.0
    %2290 = vmatpush1.msra.mxu0 0.0
    %2291 = vmatprep.subr.mxu0 0.0
    %2292 = vmatpush1.msra.mxu0 0.0
    %2293 = vmatprep.subr.mxu0 0.0
    %2294 = vmatpush1.msra.mxu0 0.0
    %2295 = vmatprep.subr.mxu0 0.0
    %2296 = vmatpush1.msra.mxu0 0.0
    %2297 = vmatprep.subr.mxu0 0.0
    %2298 = vmatpush1.msra.mxu0 0.0
    %2299 = vmatprep.subr.mxu0 0.0
    %2300 = vmatpush1.msra.mxu0 0.0
    %2301 = vmatprep.subr.mxu0 0.0
    %2302 = vmatpush1.msra.mxu0 0.0
    %2303 = vmatprep.subr.mxu0 0.0
    %2304 = vmatpush1.msra.mxu0 0.0
    %2305 = vmatprep.subr.mxu0 0.0
    %2306 = vmatpush1.msra.mxu0 0.0
    %2307 = vmatprep.subr.mxu0 0.0
    %2308 = vmatpush1.msra.mxu0 0.0
    %2309 = vmatprep.subr.mxu0 0.0
    %2310 = vmatpush1.msra.mxu0 0.0
    %2311 = vmatprep.subr.mxu0 0.0
    %2312 = vmatpush1.msra.mxu0 0.0
    %2313 = vmatprep.subr.mxu0 0.0
    %2314 = vmatpush1.msra.mxu0 0.0
    %2315 = vmatprep.subr.mxu0 0.0
    %2316 = vmatpush1.msra.mxu0 0.0
    %2317 = vmatprep.subr.mxu0 0.0
    %2318 = vmatpush1.msra.mxu0 0.0
    %2319 = vmatprep.subr.mxu0 0.0
    %2320 = vmatpush1.msra.mxu0 0.0
    %2321 = vmatprep.subr.mxu0 0.0
    %2322 = vmatpush1.msra.mxu0 0.0
    %2323 = vmatprep.subr.mxu0 0.0
    %2324 = vmatpush1.msra.mxu0 0.0
    %2325 = vmatprep.subr.mxu0 0.0
    %2326 = vmatpush1.msra.mxu0 0.0
    %2327 = vmatprep.subr.mxu0 0.0
    %2328 = vmatpush1.msra.mxu0 0.0
    %2329 = vmatprep.subr.mxu0 0.0
    %2330 = vmatpush1.msra.mxu0 0.0
    %2331 = vmatprep.subr.mxu0 0.0
    %2332 = vmatpush1.msra.mxu0 0.0
    %2333 = vmatprep.subr.mxu0 0.0
    %2334 = vmatpush1.msra.mxu0 0.0
    %2335 = vmatprep.subr.mxu0 0.0
    %2336 = vmatpush1.msra.mxu0 0.0
    %2337 = vmatprep.mubr.f32.mxu0 0.0
    %2338 = vmatmul.mubr.f32.gmra.mrb[0].mxu0 %v2271
    %v2339 = vpop.f32.mrb[0].mxu0
    %v2340 = vadd.f32 0.0, %v2339
    %v2341 = vpop.f32.mrb[0].mxu0
    %v2342 = vadd.f32 0.0, %v2341
    %2343 = vdwg.mxu0
    %2344 = vmatprep.subr.mxu0 %v1826
    %2345 = vmatpush1.msra.mxu0 %v1824
    %2346 = vmatprep.subr.mxu0 0.0
    %2347 = vmatpush1.msra.mxu0 0.0
    %2348 = vmatprep.subr.mxu0 0.0
    %2349 = vmatpush1.msra.mxu0 0.0
    %2350 = vmatprep.subr.mxu0 0.0
    %2351 = vmatpush1.msra.mxu0 0.0
    %2352 = vmatprep.subr.mxu0 0.0
    %2353 = vmatpush1.msra.mxu0 0.0
    %2354 = vmatprep.subr.mxu0 0.0
    %2355 = vmatpush1.msra.mxu0 0.0
    %2356 = vmatprep.subr.mxu0 0.0
    %2357 = vmatpush1.msra.mxu0 0.0
    %2358 = vmatprep.subr.mxu0 0.0
    %2359 = vmatpush1.msra.mxu0 0.0
    %2360 = vmatprep.subr.mxu0 0.0
    %2361 = vmatpush1.msra.mxu0 0.0
    %2362 = vmatprep.subr.mxu0 0.0
    %2363 = vmatpush1.msra.mxu0 0.0
    %2364 = vmatprep.subr.mxu0 0.0
    %2365 = vmatpush1.msra.mxu0 0.0
    %2366 = vmatprep.subr.mxu0 0.0
    %2367 = vmatpush1.msra.mxu0 0.0
    %2368 = vmatprep.subr.mxu0 0.0
    %2369 = vmatpush1.msra.mxu0 0.0
    %2370 = vmatprep.subr.mxu0 0.0
    %2371 = vmatpush1.msra.mxu0 0.0
    %2372 = vmatprep.subr.mxu0 0.0
    %2373 = vmatpush1.msra.mxu0 0.0
    %2374 = vmatprep.subr.mxu0 0.0
    %2375 = vmatpush1.msra.mxu0 0.0
    %2376 = vmatprep.subr.mxu0 0.0
    %2377 = vmatpush1.msra.mxu0 0.0
    %2378 = vmatprep.subr.mxu0 0.0
    %2379 = vmatpush1.msra.mxu0 0.0
    %2380 = vmatprep.subr.mxu0 0.0
    %2381 = vmatpush1.msra.mxu0 0.0
    %2382 = vmatprep.subr.mxu0 0.0
    %2383 = vmatpush1.msra.mxu0 0.0
    %2384 = vmatprep.subr.mxu0 0.0
    %2385 = vmatpush1.msra.mxu0 0.0
    %2386 = vmatprep.subr.mxu0 0.0
    %2387 = vmatpush1.msra.mxu0 0.0
    %2388 = vmatprep.subr.mxu0 0.0
    %2389 = vmatpush1.msra.mxu0 0.0
    %2390 = vmatprep.subr.mxu0 0.0
    %2391 = vmatpush1.msra.mxu0 0.0
    %2392 = vmatprep.subr.mxu0 0.0
    %2393 = vmatpush1.msra.mxu0 0.0
    %2394 = vmatprep.subr.mxu0 0.0
    %2395 = vmatpush1.msra.mxu0 0.0
    %2396 = vmatprep.subr.mxu0 0.0
    %2397 = vmatpush1.msra.mxu0 0.0
    %2398 = vmatprep.subr.mxu0 0.0
    %2399 = vmatpush1.msra.mxu0 0.0
    %2400 = vmatprep.subr.mxu0 0.0
    %2401 = vmatpush1.msra.mxu0 0.0
    %2402 = vmatprep.subr.mxu0 0.0
    %2403 = vmatpush1.msra.mxu0 0.0
    %2404 = vmatprep.subr.mxu0 0.0
    %2405 = vmatpush1.msra.mxu0 0.0
    %2406 = vmatprep.subr.mxu0 0.0
    %2407 = vmatpush1.msra.mxu0 0.0
    %2408 = vmatprep.mubr.f32.mxu0 0.0
    %2409 = vmatmul.mubr.f32.gmra.mrb[0].mxu0 %v2271
    %v2410 = vpop.f32.mrb[0].mxu0
    %v2411 = vadd.f32 0.0, %v2410
    %v2412 = vpop.f32.mrb[0].mxu0
    %v2413 = vadd.f32 0.0, %v2412
    %2414 = vdwg.mxu0
    %2415 = vmatprep.subr.mxu0 %v1830
    %2416 = vmatpush1.msra.mxu0 %v1828
    %2417 = vmatprep.subr.mxu0 0.0
    %2418 = vmatpush1.msra.mxu0 0.0
    %2419 = vmatprep.subr.mxu0 0.0
    %2420 = vmatpush1.msra.mxu0 0.0
    %2421 = vmatprep.subr.mxu0 0.0
    %2422 = vmatpush1.msra.mxu0 0.0
    %2423 = vmatprep.subr.mxu0 0.0
    %2424 = vmatpush1.msra.mxu0 0.0
    %2425 = vmatprep.subr.mxu0 0.0
    %2426 = vmatpush1.msra.mxu0 0.0
    %2427 = vmatprep.subr.mxu0 0.0
    %2428 = vmatpush1.msra.mxu0 0.0
    %2429 = vmatprep.subr.mxu0 0.0
    %2430 = vmatpush1.msra.mxu0 0.0
    %2431 = vmatprep.subr.mxu0 0.0
    %2432 = vmatpush1.msra.mxu0 0.0
    %2433 = vmatprep.subr.mxu0 0.0
    %2434 = vmatpush1.msra.mxu0 0.0
    %2435 = vmatprep.subr.mxu0 0.0
    %2436 = vmatpush1.msra.mxu0 0.0
    %2437 = vmatprep.subr.mxu0 0.0
    %2438 = vmatpush1.msra.mxu0 0.0
    %2439 = vmatprep.subr.mxu0 0.0
    %2440 = vmatpush1.msra.mxu0 0.0
    %2441 = vmatprep.subr.mxu0 0.0
    %2442 = vmatpush1.msra.mxu0 0.0
    %2443 = vmatprep.subr.mxu0 0.0
    %2444 = vmatpush1.msra.mxu0 0.0
    %2445 = vmatprep.subr.mxu0 0.0
    %2446 = vmatpush1.msra.mxu0 0.0
    %2447 = vmatprep.subr.mxu0 0.0
    %2448 = vmatpush1.msra.mxu0 0.0
    %2449 = vmatprep.subr.mxu0 0.0
    %2450 = vmatpush1.msra.mxu0 0.0
    %2451 = vmatprep.subr.mxu0 0.0
    %2452 = vmatpush1.msra.mxu0 0.0
    %2453 = vmatprep.subr.mxu0 0.0
    %2454 = vmatpush1.msra.mxu0 0.0
    %2455 = vmatprep.subr.mxu0 0.0
    %2456 = vmatpush1.msra.mxu0 0.0
    %2457 = vmatprep.subr.mxu0 0.0
    %2458 = vmatpush1.msra.mxu0 0.0
    %2459 = vmatprep.subr.mxu0 0.0
    %2460 = vmatpush1.msra.mxu0 0.0
    %2461 = vmatprep.subr.mxu0 0.0
    %2462 = vmatpush1.msra.mxu0 0.0
    %2463 = vmatprep.subr.mxu0 0.0
    %2464 = vmatpush1.msra.mxu0 0.0
    %2465 = vmatprep.subr.mxu0 0.0
    %2466 = vmatpush1.msra.mxu0 0.0
    %2467 = vmatprep.subr.mxu0 0.0
    %2468 = vmatpush1.msra.mxu0 0.0
    %2469 = vmatprep.subr.mxu0 0.0
    %2470 = vmatpush1.msra.mxu0 0.0
    %2471 = vmatprep.subr.mxu0 0.0
    %2472 = vmatpush1.msra.mxu0 0.0
    %2473 = vmatprep.subr.mxu0 0.0
    %2474 = vmatpush1.msra.mxu0 0.0
    %2475 = vmatprep.subr.mxu0 0.0
    %2476 = vmatpush1.msra.mxu0 0.0
    %2477 = vmatprep.subr.mxu0 0.0
    %2478 = vmatpush1.msra.mxu0 0.0
    %2479 = vmatprep.mubr.f32.mxu0 0.0
    %2480 = vmatmul.mubr.f32.gmra.mrb[0].mxu0 %v2271
    %v2481 = vpop.f32.mrb[0].mxu0
    %v2482 = vadd.f32 0.0, %v2481
    %v2483 = vpop.f32.mrb[0].mxu0
    %v2484 = vadd.f32 0.0, %v2483
    %2485 = vdwg.mxu0
    %v2486 = vmul.f32 %v2045, %v2340
    %v2487 = vmul.f32 %v2046, %v2342
    %v2488 = vmul.f32 %v2047, %v2411
    %v2489 = vmul.f32 %v2048, %v2413
    %v2490 = vmul.f32 %v2049, %v2482
    %v2491 = vmul.f32 %v2050, %v2484
    %v2492 = vmax.f32 %v2486, 0.0
    %v2493 = vmax.f32 %v2487, 0.0
    %v2494 = vmax.f32 %v2488, 0.0
    %v2495 = vmax.f32 %v2489, 0.0
    %v2496 = vmax.f32 %v2490, 0.0
    %v2497 = vmax.f32 %v2491, 0.0
    %2498 = vst [vmem:[#allocation2] sm:$0xff] %v2492
    %2499 = vst [vmem:[#allocation2 + $0x8] sm:$0xff] %v2493
    %2500 = vst [vmem:[#allocation2 + $0x10] sm:$0xff] %v2494
    %2501 = vst [vmem:[#allocation2 + $0x18] sm:$0xff] %v2495
    %2502 = vst [vmem:[#allocation2 + $0x20] sm:$0xff] %v2496
    %2503 = vst [vmem:[#allocation2 + $0x28] sm:$0xff] %v2497
    // Predicated region
    $region14: #{tpu_custom_call.1} parent=1 // pred_check
      _
    $region15: #{tpu_custom_call.1} parent=1 // pred_check_branch
      %2505 = sbr.rel (0) target = $region17
    $region16: #{tpu_custom_call.1} parent=1 // pred_region
      %s2507 = ssub.s32 768, 768
      %2508 = vsyncadd [#allocation3], %s2507
      %s2510 = sshll.u32 [#allocation2], 4
      %s2511 = int_to_ptr.vmem [resolvable:$true] %s2510
      %2513 = dma.vmem_to_hbm [thread:$0]  %s2511, 768, %s3, [#allocation3]
    $region17: #{tpu_custom_call.1} parent=1 // pred_fallthru
      _
    // Predicated region
    $region18: #{tpu_custom_call.1} parent=1 // pred_check
      _
    $region19: #{tpu_custom_call.1} parent=1 // pred_check_branch
      %2515 = sbr.rel (0) target = $region21
    $region20: #{tpu_custom_call.1} parent=1 // pred_region
      %2516 = dma.done [#allocation3], 768
    $region21: #{tpu_custom_call.1} parent=1 // pred_fallthru
      _
    %2517 = vsyncpa [#allocation3], 1

</llo_original>
